<compile_context>
chip_gen: v7x
topology: tpu7x:2x2x1
jax: 0.10.0
libtpu: 0.0.40
codegen_flags: <defaults>
</compile_context>

<pallas_src>
import jax
import jax.numpy as jnp
from jax.experimental import pallas as pl
from jax.experimental.pallas import tpu as pltpu

TB = 128          # batch tile (MXU-row filling; safe on v5e/v6e/v7x VMEM)
K_IN = 28 * 28    # 784
K_PAD = 896       # 7 * 128, lane-aligned contraction dim for fc1
H = 256           # hidden width
N_OUT = 2         # true classifier width
N_PAD = 128       # lane-dense padded output width


def _mlp2_kernel(x_ref, w1_ref, b1_ref, w2_ref, b2_ref, w3_ref, b3_ref, o_ref):
    # bf16 operands on the MXU with f32 accumulation; elementwise work in f32
    # (v5e's VPU has no bf16 ALU).
    x = x_ref[...]                                                       # (TB, 896) bf16
    h1 = jnp.dot(x, w1_ref[...], preferred_element_type=jnp.float32) + b1_ref[...]
    h1 = jnp.maximum(h1, 0.0)
    h2 = jnp.dot(h1.astype(jnp.bfloat16), w2_ref[...],
                 preferred_element_type=jnp.float32) + b2_ref[...]
    h2 = jnp.maximum(h2, 0.0)
    out = jnp.dot(h2.astype(jnp.bfloat16), w3_ref[...],
                  preferred_element_type=jnp.float32) + b3_ref[...]
    o_ref[...] = out.astype(o_ref.dtype)                                 # (TB, 128) f32


def mlp2_forward(x_nchw, params):
    """x_nchw: (B, 1, 28, 28) float32 -> (B, 2) float32."""
    w1, b1, w2, b2, w3, b3 = params
    B = x_nchw.shape[0]

    # nn.Flatten (NCHW with C=1 -> row-major 784 features)
    x_flat = x_nchw.reshape(B, -1).astype(jnp.float32)

    # Exact-zero padding: K 784 -> 896, batch B -> multiple of TB.
    Bp = pl.cdiv(B, TB) * TB
    x_flat = jnp.pad(x_flat, ((0, Bp - B), (0, K_PAD - K_IN))).astype(jnp.bfloat16)

    # Pad/cast weights (zero rows/cols keep the math exact); biases stay f32.
    w1p = jnp.pad(w1, ((0, K_PAD - K_IN), (0, 0))).astype(jnp.bfloat16)   # (896, 256)
    w2p = w2.astype(jnp.bfloat16)                                         # (256, 256)
    w3p = jnp.pad(w3, ((0, 0), (0, N_PAD - N_OUT))).astype(jnp.bfloat16)  # (256, 128)
    b1p = b1.astype(jnp.float32)                                          # (1, 256)
    b2p = b2.astype(jnp.float32)                                          # (1, 256)
    b3p = jnp.pad(b3, ((0, 0), (0, N_PAD - N_OUT))).astype(jnp.float32)   # (1, 128)

    grid = (Bp // TB,)

    # Weights/biases: constant block index -> fetched once, resident across grid steps.
    def resident(a):
        return pl.BlockSpec(a.shape, lambda i: (0,) * a.ndim)

    flops = 2 * B * (K_IN * H + H * H + H * N_OUT)
    bytes_accessed = (x_flat.size * 2                      # bf16 x tiles
                      + (w1p.size + w2p.size + w3p.size) * 2
                      + (b1p.size + b2p.size + b3p.size) * 4
                      + Bp * N_PAD * 4)                    # f32 output

    out_padded = pl.pallas_call(
        _mlp2_kernel,
        out_shape=jax.ShapeDtypeStruct((Bp, N_PAD), jnp.float32),
        grid=grid,
        in_specs=[pl.BlockSpec((TB, K_PAD), lambda i: (i, 0)),
                  resident(w1p), resident(b1p),
                  resident(w2p), resident(b2p),
                  resident(w3p), resident(b3p)],
        out_specs=pl.BlockSpec((TB, N_PAD), lambda i: (i, 0)),
        compiler_params=pltpu.CompilerParams(dimension_semantics=("parallel",)),
        cost_estimate=pl.CostEstimate(flops=flops, transcendentals=0,
                                      bytes_accessed=bytes_accessed),
    )(x_flat, w1p, b1p, w2p, b2p, w3p, b3p)

    # Drop batch padding and the lane padding of the 2-wide classifier.
    return out_padded[:B, :N_OUT]


def init_params(key):
    """Deterministic parameter init (shapes match the PyTorch module, weights transposed)."""
    k1, k2, k3, k4, k5, k6 = jax.random.split(key, 6)

    def linear(kw, kb, fan_in, fan_out):
        # PyTorch default Linear init: U(-1/sqrt(fan_in), 1/sqrt(fan_in))
        bound = 1.0 / jnp.sqrt(fan_in)
        w = jax.random.uniform(kw, (fan_in, fan_out), jnp.float32, -bound, bound)
        b = jax.random.uniform(kb, (1, fan_out), jnp.float32, -bound, bound)
        return w, b

    w1, b1 = linear(k1, k2, K_IN, H)
    w2, b2 = linear(k3, k4, H, H)
    w3, b3 = linear(k5, k6, H, N_OUT)
    return (w1, b1, w2, b2, w3, b3)


def mlp2_reference(x_nchw, params):
    w1, b1, w2, b2, w3, b3 = params
    x = x_nchw.reshape(x_nchw.shape[0], -1)
    h1 = jnp.maximum(x @ w1 + b1, 0.0)
    h2 = jnp.maximum(h1 @ w2 + b2, 0.0)
    return h2 @ w3 + b3


if __name__ == "__main__":
    key = jax.random.PRNGKey(0)
    kx, kp = jax.random.split(key)

    B = 8
    x = jax.random.normal(kx, (B, 1, 28, 28), dtype=jnp.float32)
    params = init_params(kp)

    out = mlp2_forward(x, params)
    out = jax.block_until_ready(out)

    ref = mlp2_reference(x, params)
    assert out.shape == (B, 2), out.shape
    # bf16 matmul operands with f32 accumulation -> looser tolerance than pure f32.
    assert jnp.allclose(out, ref, atol=5e-2, rtol=5e-2), "mismatch vs JAX reference"

    print("KERNEL_OK")
</pallas_src>

<mosaic_0001>
module attributes {stable_mosaic.version = 11 : i64} {
  func.func @_mlp2_kernel(%arg0: i32, %arg1: memref<128x896xbf16, #tpu.memory_space<vmem>>, %arg2: memref<896x256xbf16, #tpu.memory_space<vmem>>, %arg3: memref<1x256xf32, #tpu.memory_space<vmem>>, %arg4: memref<256x256xbf16, #tpu.memory_space<vmem>>, %arg5: memref<1x256xf32, #tpu.memory_space<vmem>>, %arg6: memref<256x128xbf16, #tpu.memory_space<vmem>>, %arg7: memref<1x128xf32, #tpu.memory_space<vmem>>, %arg8: memref<128x128xf32, #tpu.memory_space<vmem>>) attributes {dimension_semantics = [#tpu.dimension_semantics<parallel>], iteration_bounds = array<i64: 1>, scalar_prefetch = 0 : i64, scratch_operands = 0 : i64, tpu.core_type = #tpu.core_type<tc>, window_params = [{transform_indices = @transform_0, window_bounds = array<i64: 128, 896>}, {pipeline_mode = #tpu.pipeline_mode<synchronous>, transform_indices = @transform_1, window_bounds = array<i64: 896, 256>}, {pipeline_mode = #tpu.pipeline_mode<synchronous>, transform_indices = @transform_2, window_bounds = array<i64: 1, 256>}, {pipeline_mode = #tpu.pipeline_mode<synchronous>, transform_indices = @transform_3, window_bounds = array<i64: 256, 256>}, {pipeline_mode = #tpu.pipeline_mode<synchronous>, transform_indices = @transform_4, window_bounds = array<i64: 1, 256>}, {pipeline_mode = #tpu.pipeline_mode<synchronous>, transform_indices = @transform_5, window_bounds = array<i64: 256, 128>}, {pipeline_mode = #tpu.pipeline_mode<synchronous>, transform_indices = @transform_6, window_bounds = array<i64: 1, 128>}, {transform_indices = @transform_7, window_bounds = array<i64: 128, 128>}]} {
    %c0 = arith.constant 0 : index
    %c0_0 = arith.constant 0 : index
    %0 = vector.load %arg1[%c0, %c0_0] : memref<128x896xbf16, #tpu.memory_space<vmem>>, vector<128x896xbf16>
    %c0_1 = arith.constant 0 : index
    %c0_2 = arith.constant 0 : index
    %1 = vector.load %arg2[%c0_1, %c0_2] : memref<896x256xbf16, #tpu.memory_space<vmem>>, vector<896x256xbf16>
    %cst = arith.constant dense<0.000000e+00> : vector<128x256xf32>
    %2 = tpu.matmul %0, %1, %cst {dimension_numbers = #tpu.dot_dimension_numbers<[1], [0], [0], [1], [0, 0, 1, 1], [], []>} : vector<128x896xbf16>, vector<896x256xbf16>, vector<128x256xf32> -> vector<128x256xf32>
    %c0_3 = arith.constant 0 : index
    %c0_4 = arith.constant 0 : index
    %3 = vector.load %arg3[%c0_3, %c0_4] : memref<1x256xf32, #tpu.memory_space<vmem>>, vector<1x256xf32>
    %4 = vector.broadcast %3 : vector<1x256xf32> to vector<128x256xf32>
    %5 = arith.addf %2, %4 : vector<128x256xf32>
    %cst_5 = arith.constant 0.000000e+00 : f32
    %6 = vector.broadcast %cst_5 : f32 to vector<128x256xf32>
    %7 = arith.maximumf %5, %6 : vector<128x256xf32>
    %8 = arith.truncf %7 : vector<128x256xf32> to vector<128x256xbf16>
    %c0_6 = arith.constant 0 : index
    %c0_7 = arith.constant 0 : index
    %9 = vector.load %arg4[%c0_6, %c0_7] : memref<256x256xbf16, #tpu.memory_space<vmem>>, vector<256x256xbf16>
    %cst_8 = arith.constant dense<0.000000e+00> : vector<128x256xf32>
    %10 = tpu.matmul %8, %9, %cst_8 {dimension_numbers = #tpu.dot_dimension_numbers<[1], [0], [0], [1], [0, 0, 1, 1], [], []>} : vector<128x256xbf16>, vector<256x256xbf16>, vector<128x256xf32> -> vector<128x256xf32>
    %c0_9 = arith.constant 0 : index
    %c0_10 = arith.constant 0 : index
    %11 = vector.load %arg5[%c0_9, %c0_10] : memref<1x256xf32, #tpu.memory_space<vmem>>, vector<1x256xf32>
    %12 = vector.broadcast %11 : vector<1x256xf32> to vector<128x256xf32>
    %13 = arith.addf %10, %12 : vector<128x256xf32>
    %cst_11 = arith.constant 0.000000e+00 : f32
    %14 = vector.broadcast %cst_11 : f32 to vector<128x256xf32>
    %15 = arith.maximumf %13, %14 : vector<128x256xf32>
    %16 = arith.truncf %15 : vector<128x256xf32> to vector<128x256xbf16>
    %c0_12 = arith.constant 0 : index
    %c0_13 = arith.constant 0 : index
    %17 = vector.load %arg6[%c0_12, %c0_13] : memref<256x128xbf16, #tpu.memory_space<vmem>>, vector<256x128xbf16>
    %cst_14 = arith.constant dense<0.000000e+00> : vector<128x128xf32>
    %18 = tpu.matmul %16, %17, %cst_14 {dimension_numbers = #tpu.dot_dimension_numbers<[1], [0], [0], [1], [0, 0, 1, 1], [], []>} : vector<128x256xbf16>, vector<256x128xbf16>, vector<128x128xf32> -> vector<128x128xf32>
    %c0_15 = arith.constant 0 : index
    %c0_16 = arith.constant 0 : index
    %19 = vector.load %arg7[%c0_15, %c0_16] : memref<1x128xf32, #tpu.memory_space<vmem>>, vector<1x128xf32>
    %20 = vector.broadcast %19 : vector<1x128xf32> to vector<128x128xf32>
    %21 = arith.addf %18, %20 : vector<128x128xf32>
    %c0_17 = arith.constant 0 : index
    %c0_18 = arith.constant 0 : index
    %22 = vector.load %arg8[%c0_17, %c0_18] : memref<128x128xf32, #tpu.memory_space<vmem>>, vector<128x128xf32>
    tpu.vector_store %arg8[%c0_17, %c0_18], %21 {strides = array<i32>} : memref<128x128xf32, #tpu.memory_space<vmem>>, vector<128x128xf32>,
    return
  }
  func.func @transform_0(%arg0: i32) -> (i32, i32) {
    %c0_i32 = arith.constant 0 : i32
    %c0_i32_0 = arith.constant 0 : i32
    return %arg0, %c0_i32 : i32, i32
  }
  func.func @transform_1(%arg0: i32) -> (i32, i32) {
    %c0_i32 = arith.constant 0 : i32
    %c0_i32_0 = arith.constant 0 : i32
    %c0_i32_1 = arith.constant 0 : i32
    return %c0_i32, %c0_i32_0 : i32, i32
  }
  func.func @transform_2(%arg0: i32) -> (i32, i32) {
    %c0_i32 = arith.constant 0 : i32
    %c0_i32_0 = arith.constant 0 : i32
    %c0_i32_1 = arith.constant 0 : i32
    return %c0_i32, %c0_i32_0 : i32, i32
  }
  func.func @transform_3(%arg0: i32) -> (i32, i32) {
    %c0_i32 = arith.constant 0 : i32
    %c0_i32_0 = arith.constant 0 : i32
    %c0_i32_1 = arith.constant 0 : i32
    return %c0_i32, %c0_i32_0 : i32, i32
  }
  func.func @transform_4(%arg0: i32) -> (i32, i32) {
    %c0_i32 = arith.constant 0 : i32
    %c0_i32_0 = arith.constant 0 : i32
    %c0_i32_1 = arith.constant 0 : i32
    return %c0_i32, %c0_i32_0 : i32, i32
  }
  func.func @transform_5(%arg0: i32) -> (i32, i32) {
    %c0_i32 = arith.constant 0 : i32
    %c0_i32_0 = arith.constant 0 : i32
    %c0_i32_1 = arith.constant 0 : i32
    return %c0_i32, %c0_i32_0 : i32, i32
  }
  func.func @transform_6(%arg0: i32) -> (i32, i32) {
    %c0_i32 = arith.constant 0 : i32
    %c0_i32_0 = arith.constant 0 : i32
    %c0_i32_1 = arith.constant 0 : i32
    return %c0_i32, %c0_i32_0 : i32, i32
  }
  func.func @transform_7(%arg0: i32) -> (i32, i32) {
    %c0_i32 = arith.constant 0 : i32
    %c0_i32_0 = arith.constant 0 : i32
    return %arg0, %c0_i32 : i32, i32
  }
}

</mosaic_0001>

<llo_original>
// kernel: tpu_custom_call.1
$region0: #{tpu_custom_call.1}
  #allocation0 [shape = 'u32[]', space=smem, size = 0x4, offset = 0x4, fixed_abs, tag = 'smem constant byte address 0x4 - core index']
  #allocation1 [shape = 'u32[144,128]{1,0:T(1,128)}', space=vmem, size = 0x12000, scoped, tag = 'internal scratch']
  %s0 = inlined_call_operand.hbm [shape: bf16[128,896], index: 0, kind: input, shape index: {}]
  %s1 = inlined_call_operand.hbm [shape: bf16[896,256], index: 1, kind: input, shape index: {}]
  %s2 = inlined_call_operand.vmem [shape: f32[1,256], index: 2, kind: input, shape index: {}]
  %s3 = inlined_call_operand.hbm [shape: bf16[256,256], index: 3, kind: input, shape index: {}]
  %s4 = inlined_call_operand.vmem [shape: f32[1,256], index: 4, kind: input, shape index: {}]
  %s5 = inlined_call_operand.hbm [shape: bf16[256,128], index: 5, kind: input, shape index: {}]
  %s6 = inlined_call_operand.vmem [shape: f32[1,128], index: 6, kind: input, shape index: {}]
  %s7 = inlined_call_operand.hbm [shape: f32[128,128], index: 7, kind: output, shape index: {}]
  %s8 = sld [smem:[#allocation0]]
  $region54: #{tpu_custom_call.1} parent=0
    _
  %s10 = ssub.s32 1, %s8
  %s11 = scalar_select 0, %s10, %s8
  $region1: #{tpu_custom_call.1} parent=0
    #allocation2 [shape = 'u8[229376]{0}', space=vmem, size = 0x38000, scoped, tag = 'input window, operand 0, single buffered']
    #allocation3 [shape = 's32[1]{0}', space=sflag, size = 0x4, scoped, tag = 'scoped memory for tpu_custom_call.1']
    #allocation4 [shape = 's32[1]{0}', space=sflag, size = 0x4, scoped, tag = 'scoped memory for tpu_custom_call.1']
    #allocation5 [shape = 'u8[458752]{0}', space=vmem, size = 0x70000, scoped, tag = 'input window, operand 1, single buffered']
    #allocation6 [shape = 's32[1]{0}', space=sflag, size = 0x4, scoped, tag = 'scoped memory for tpu_custom_call.1']
    #allocation7 [shape = 'u8[131072]{0}', space=vmem, size = 0x20000, scoped, tag = 'input window, operand 3, single buffered']
    #allocation8 [shape = 'u8[65536]{0}', space=vmem, size = 0x10000, scoped, tag = 'input window, operand 5, single buffered']
    #allocation9 [shape = 's32[1]{0}', space=sflag, size = 0x4, scoped, tag = 'scoped memory for tpu_custom_call.1']
    #allocation10 [shape = 'u8[65536]{0}', space=vmem, size = 0x10000, scoped, tag = 'output window, operand 0, single buffered']
    %12 = vsyncpa [#allocation3], 0
    %13 = vsyncpa [#allocation6], 0
    %14 = vsyncpa [#allocation9], 0
    %15 = vsyncpa [#allocation4], 0
    // Predicated region
    $region2: #{tpu_custom_call.1} parent=1 // pred_check
      _
    $region3: #{tpu_custom_call.1} parent=1 // pred_check_branch
      %17 = sbr.rel (0) target = $region5
    $region4: #{tpu_custom_call.1} parent=1 // pred_region
      %s19 = ssub.s32 7168, 7168
      %20 = vsyncadd [#allocation3], %s19
      %s21 = sshll.u32 [#allocation2], 4
      %s22 = int_to_ptr.vmem [resolvable:$true] %s21
      %27 = dma.hbm_to_vmem [thread:$0]  %s0, 7168, %s22, [#allocation3], 448, 448, 28
    $region5: #{tpu_custom_call.1} parent=1 // pred_fallthru
      _
    // Predicated region
    $region6: #{tpu_custom_call.1} parent=1 // pred_check
      _
    $region7: #{tpu_custom_call.1} parent=1 // pred_check_branch
      %29 = sbr.rel (0) target = $region9
    $region8: #{tpu_custom_call.1} parent=1 // pred_region
      %s31 = ssub.s32 14336, 14336
      %32 = vsyncadd [#allocation6], %s31
      %s33 = sshll.u32 [#allocation5], 4
      %s34 = int_to_ptr.vmem [resolvable:$true] %s33
      %39 = dma.hbm_to_vmem [thread:$0]  %s1, 14336, %s34, [#allocation6], 128, 128, 8
    $region9: #{tpu_custom_call.1} parent=1 // pred_fallthru
      _
    // Predicated region
    $region10: #{tpu_custom_call.1} parent=1 // pred_check
      _
    $region11: #{tpu_custom_call.1} parent=1 // pred_check_branch
      %41 = sbr.rel (0) target = $region13
    $region12: #{tpu_custom_call.1} parent=1 // pred_region
      _
    $region13: #{tpu_custom_call.1} parent=1 // pred_fallthru
      _
    // Predicated region
    $region14: #{tpu_custom_call.1} parent=1 // pred_check
      _
    $region15: #{tpu_custom_call.1} parent=1 // pred_check_branch
      %43 = sbr.rel (0) target = $region17
    $region16: #{tpu_custom_call.1} parent=1 // pred_region
      %s45 = ssub.s32 4096, 4096
      %46 = vsyncadd [#allocation6], %s45
      %s47 = sshll.u32 [#allocation7], 4
      %s48 = int_to_ptr.vmem [resolvable:$true] %s47
      %53 = dma.hbm_to_vmem [thread:$0]  %s3, 4096, %s48, [#allocation6], 128, 128, 8
    $region17: #{tpu_custom_call.1} parent=1 // pred_fallthru
      _
    // Predicated region
    $region18: #{tpu_custom_call.1} parent=1 // pred_check
      _
    $region19: #{tpu_custom_call.1} parent=1 // pred_check_branch
      %55 = sbr.rel (0) target = $region21
    $region20: #{tpu_custom_call.1} parent=1 // pred_region
      _
    $region21: #{tpu_custom_call.1} parent=1 // pred_fallthru
      _
    // Predicated region
    $region22: #{tpu_custom_call.1} parent=1 // pred_check
      _
    $region23: #{tpu_custom_call.1} parent=1 // pred_check_branch
      %57 = sbr.rel (0) target = $region25
    $region24: #{tpu_custom_call.1} parent=1 // pred_region
      %s59 = ssub.s32 2048, 2048
      %60 = vsyncadd [#allocation9], %s59
      %s61 = sshll.u32 [#allocation8], 4
      %s62 = int_to_ptr.vmem [resolvable:$true] %s61
      %67 = dma.hbm_to_vmem [thread:$0]  %s5, 2048, %s62, [#allocation9], 64, 64, 4
    $region25: #{tpu_custom_call.1} parent=1 // pred_fallthru
      _
    // Predicated region
    $region26: #{tpu_custom_call.1} parent=1 // pred_check
      _
    $region27: #{tpu_custom_call.1} parent=1 // pred_check_branch
      %69 = sbr.rel (0) target = $region29
    $region28: #{tpu_custom_call.1} parent=1 // pred_region
      _
    $region29: #{tpu_custom_call.1} parent=1 // pred_fallthru
      _
    // Predicated region
    $region30: #{tpu_custom_call.1} parent=1 // pred_check
      _
    $region31: #{tpu_custom_call.1} parent=1 // pred_check_branch
      %71 = sbr.rel (0) target = $region33
    $region32: #{tpu_custom_call.1} parent=1 // pred_region
      %72 = dma.done [#allocation3], 7168
    $region33: #{tpu_custom_call.1} parent=1 // pred_fallthru
      _
    // Predicated region
    $region34: #{tpu_custom_call.1} parent=1 // pred_check
      _
    $region35: #{tpu_custom_call.1} parent=1 // pred_check_branch
      %74 = sbr.rel (0) target = $region37
    $region36: #{tpu_custom_call.1} parent=1 // pred_region
      %75 = dma.done [#allocation6], 14336
    $region37: #{tpu_custom_call.1} parent=1 // pred_fallthru
      _
    // Predicated region
    $region38: #{tpu_custom_call.1} parent=1 // pred_check
      _
    $region39: #{tpu_custom_call.1} parent=1 // pred_check_branch
      %77 = sbr.rel (0) target = $region41
    $region40: #{tpu_custom_call.1} parent=1 // pred_region
      %78 = dma.done [#allocation6], 4096
    $region41: #{tpu_custom_call.1} parent=1 // pred_fallthru
      _
    // Predicated region
    $region42: #{tpu_custom_call.1} parent=1 // pred_check
      _
    $region43: #{tpu_custom_call.1} parent=1 // pred_check_branch
      %80 = sbr.rel (0) target = $region45
    $region44: #{tpu_custom_call.1} parent=1 // pred_region
      %81 = dma.done [#allocation9], 2048
    $region45: #{tpu_custom_call.1} parent=1 // pred_fallthru
      _
    %v83 = vld [vmem:[#allocation2] sm:$0xff]
    %v84 = vld [vmem:[#allocation2 + $0x8] sm:$0xff]
    %v85 = vld [vmem:[#allocation2 + $0x10] sm:$0xff]
    %v86 = vld [vmem:[#allocation2 + $0x18] sm:$0xf]
    %v87 = vld [vmem:[#allocation2 + $0x1c] sm:$0xff]
    %v88 = vld [vmem:[#allocation2 + $0x24] sm:$0xff]
    %v89 = vld [vmem:[#allocation2 + $0x2c] sm:$0xff]
    %v90 = vld [vmem:[#allocation2 + $0x34] sm:$0xf]
    %v91 = vld [vmem:[#allocation2 + $0x38] sm:$0xff]
    %v92 = vld [vmem:[#allocation2 + $0x40] sm:$0xff]
    %v93 = vld [vmem:[#allocation2 + $0x48] sm:$0xff]
    %v94 = vld [vmem:[#allocation2 + $0x50] sm:$0xf]
    %v95 = vld [vmem:[#allocation2 + $0x54] sm:$0xff]
    %v96 = vld [vmem:[#allocation2 + $0x5c] sm:$0xff]
    %v97 = vld [vmem:[#allocation2 + $0x64] sm:$0xff]
    %v98 = vld [vmem:[#allocation2 + $0x6c] sm:$0xf]
    %v99 = vld [vmem:[#allocation2 + $0x70] sm:$0xff]
    %v100 = vld [vmem:[#allocation2 + $0x78] sm:$0xff]
    %v101 = vld [vmem:[#allocation2 + $0x80] sm:$0xff]
    %v102 = vld [vmem:[#allocation2 + $0x88] sm:$0xf]
    %v103 = vld [vmem:[#allocation2 + $0x8c] sm:$0xff]
    %v104 = vld [vmem:[#allocation2 + $0x94] sm:$0xff]
    %v105 = vld [vmem:[#allocation2 + $0x9c] sm:$0xff]
    %v106 = vld [vmem:[#allocation2 + $0xa4] sm:$0xf]
    %v107 = vld [vmem:[#allocation2 + $0xa8] sm:$0xff]
    %v108 = vld [vmem:[#allocation2 + $0xb0] sm:$0xff]
    %v109 = vld [vmem:[#allocation2 + $0xb8] sm:$0xff]
    %v110 = vld [vmem:[#allocation2 + $0xc0] sm:$0xf]
    %v111 = vld [vmem:[#allocation2 + $0xc4] sm:$0xff]
    %v112 = vld [vmem:[#allocation2 + $0xcc] sm:$0xff]
    %v113 = vld [vmem:[#allocation2 + $0xd4] sm:$0xff]
    %v114 = vld [vmem:[#allocation2 + $0xdc] sm:$0xf]
    %v115 = vld [vmem:[#allocation2 + $0xe0] sm:$0xff]
    %v116 = vld [vmem:[#allocation2 + $0xe8] sm:$0xff]
    %v117 = vld [vmem:[#allocation2 + $0xf0] sm:$0xff]
    %v118 = vld [vmem:[#allocation2 + $0xf8] sm:$0xf]
    %v119 = vld [vmem:[#allocation2 + $0xfc] sm:$0xff]
    %v120 = vld [vmem:[#allocation2 + $0x104] sm:$0xff]
    %v121 = vld [vmem:[#allocation2 + $0x10c] sm:$0xff]
    %v122 = vld [vmem:[#allocation2 + $0x114] sm:$0xf]
    %v123 = vld [vmem:[#allocation2 + $0x118] sm:$0xff]
    %v124 = vld [vmem:[#allocation2 + $0x120] sm:$0xff]
    %v125 = vld [vmem:[#allocation2 + $0x128] sm:$0xff]
    %v126 = vld [vmem:[#allocation2 + $0x130] sm:$0xf]
    %v127 = vld [vmem:[#allocation2 + $0x134] sm:$0xff]
    %v128 = vld [vmem:[#allocation2 + $0x13c] sm:$0xff]
    %v129 = vld [vmem:[#allocation2 + $0x144] sm:$0xff]
    %v130 = vld [vmem:[#allocation2 + $0x14c] sm:$0xf]
    %v131 = vld [vmem:[#allocation2 + $0x150] sm:$0xff]
    %v132 = vld [vmem:[#allocation2 + $0x158] sm:$0xff]
    %v133 = vld [vmem:[#allocation2 + $0x160] sm:$0xff]
    %v134 = vld [vmem:[#allocation2 + $0x168] sm:$0xf]
    %v135 = vld [vmem:[#allocation2 + $0x16c] sm:$0xff]
    %v136 = vld [vmem:[#allocation2 + $0x174] sm:$0xff]
    %v137 = vld [vmem:[#allocation2 + $0x17c] sm:$0xff]
    %v138 = vld [vmem:[#allocation2 + $0x184] sm:$0xf]
    %v139 = vld [vmem:[#allocation2 + $0x188] sm:$0xff]
    %v140 = vld [vmem:[#allocation2 + $0x190] sm:$0xff]
    %v141 = vld [vmem:[#allocation2 + $0x198] sm:$0xff]
    %v142 = vld [vmem:[#allocation2 + $0x1a0] sm:$0xf]
    %v143 = vld [vmem:[#allocation2 + $0x1a4] sm:$0xff]
    %v144 = vld [vmem:[#allocation2 + $0x1ac] sm:$0xff]
    %v145 = vld [vmem:[#allocation2 + $0x1b4] sm:$0xff]
    %v146 = vld [vmem:[#allocation2 + $0x1bc] sm:$0xf]
    %v147 = vld [vmem:[#allocation5] sm:$0xff]
    %v148 = vld [vmem:[#allocation5 + $0x8] sm:$0xff]
    %v149 = vld [vmem:[#allocation5 + $0x10] sm:$0xff]
    %v150 = vld [vmem:[#allocation5 + $0x18] sm:$0xff]
    %v151 = vld [vmem:[#allocation5 + $0x20] sm:$0xff]
    %v152 = vld [vmem:[#allocation5 + $0x28] sm:$0xff]
    %v153 = vld [vmem:[#allocation5 + $0x30] sm:$0xff]
    %v154 = vld [vmem:[#allocation5 + $0x38] sm:$0xff]
    %v155 = vld [vmem:[#allocation5 + $0x40] sm:$0xff]
    %v156 = vld [vmem:[#allocation5 + $0x48] sm:$0xff]
    %v157 = vld [vmem:[#allocation5 + $0x50] sm:$0xff]
    %v158 = vld [vmem:[#allocation5 + $0x58] sm:$0xff]
    %v159 = vld [vmem:[#allocation5 + $0x60] sm:$0xff]
    %v160 = vld [vmem:[#allocation5 + $0x68] sm:$0xff]
    %v161 = vld [vmem:[#allocation5 + $0x70] sm:$0xff]
    %v162 = vld [vmem:[#allocation5 + $0x78] sm:$0xff]
    %v163 = vld [vmem:[#allocation5 + $0x80] sm:$0xff]
    %v164 = vld [vmem:[#allocation5 + $0x88] sm:$0xff]
    %v165 = vld [vmem:[#allocation5 + $0x90] sm:$0xff]
    %v166 = vld [vmem:[#allocation5 + $0x98] sm:$0xff]
    %v167 = vld [vmem:[#allocation5 + $0xa0] sm:$0xff]
    %v168 = vld [vmem:[#allocation5 + $0xa8] sm:$0xff]
    %v169 = vld [vmem:[#allocation5 + $0xb0] sm:$0xff]
    %v170 = vld [vmem:[#allocation5 + $0xb8] sm:$0xff]
    %v171 = vld [vmem:[#allocation5 + $0xc0] sm:$0xff]
    %v172 = vld [vmem:[#allocation5 + $0xc8] sm:$0xff]
    %v173 = vld [vmem:[#allocation5 + $0xd0] sm:$0xff]
    %v174 = vld [vmem:[#allocation5 + $0xd8] sm:$0xff]
    %v175 = vld [vmem:[#allocation5 + $0xe0] sm:$0xff]
    %v176 = vld [vmem:[#allocation5 + $0xe8] sm:$0xff]
    %v177 = vld [vmem:[#allocation5 + $0xf0] sm:$0xff]
    %v178 = vld [vmem:[#allocation5 + $0xf8] sm:$0xff]
    %v179 = vld [vmem:[#allocation5 + $0x100] sm:$0xff]
    %v180 = vld [vmem:[#allocation5 + $0x108] sm:$0xff]
    %v181 = vld [vmem:[#allocation5 + $0x110] sm:$0xff]
    %v182 = vld [vmem:[#allocation5 + $0x118] sm:$0xff]
    %v183 = vld [vmem:[#allocation5 + $0x120] sm:$0xff]
    %v184 = vld [vmem:[#allocation5 + $0x128] sm:$0xff]
    %v185 = vld [vmem:[#allocation5 + $0x130] sm:$0xff]
    %v186 = vld [vmem:[#allocation5 + $0x138] sm:$0xff]
    %v187 = vld [vmem:[#allocation5 + $0x140] sm:$0xff]
    %v188 = vld [vmem:[#allocation5 + $0x148] sm:$0xff]
    %v189 = vld [vmem:[#allocation5 + $0x150] sm:$0xff]
    %v190 = vld [vmem:[#allocation5 + $0x158] sm:$0xff]
    %v191 = vld [vmem:[#allocation5 + $0x160] sm:$0xff]
    %v192 = vld [vmem:[#allocation5 + $0x168] sm:$0xff]
    %v193 = vld [vmem:[#allocation5 + $0x170] sm:$0xff]
    %v194 = vld [vmem:[#allocation5 + $0x178] sm:$0xff]
    %v195 = vld [vmem:[#allocation5 + $0x180] sm:$0xff]
    %v196 = vld [vmem:[#allocation5 + $0x188] sm:$0xff]
    %v197 = vld [vmem:[#allocation5 + $0x190] sm:$0xff]
    %v198 = vld [vmem:[#allocation5 + $0x198] sm:$0xff]
    %v199 = vld [vmem:[#allocation5 + $0x1a0] sm:$0xff]
    %v200 = vld [vmem:[#allocation5 + $0x1a8] sm:$0xff]
    %v201 = vld [vmem:[#allocation5 + $0x1b0] sm:$0xff]
    %v202 = vld [vmem:[#allocation5 + $0x1b8] sm:$0xff]
    %v203 = vld [vmem:[#allocation5 + $0x1c0] sm:$0xff]
    %v204 = vld [vmem:[#allocation5 + $0x1c8] sm:$0xff]
    %v205 = vld [vmem:[#allocation5 + $0x1d0] sm:$0xff]
    %v206 = vld [vmem:[#allocation5 + $0x1d8] sm:$0xff]
    %v207 = vld [vmem:[#allocation5 + $0x1e0] sm:$0xff]
    %v208 = vld [vmem:[#allocation5 + $0x1e8] sm:$0xff]
    %v209 = vld [vmem:[#allocation5 + $0x1f0] sm:$0xff]
    %v210 = vld [vmem:[#allocation5 + $0x1f8] sm:$0xff]
    %v211 = vld [vmem:[#allocation5 + $0x200] sm:$0xff]
    %v212 = vld [vmem:[#allocation5 + $0x208] sm:$0xff]
    %v213 = vld [vmem:[#allocation5 + $0x210] sm:$0xff]
    %v214 = vld [vmem:[#allocation5 + $0x218] sm:$0xff]
    %v215 = vld [vmem:[#allocation5 + $0x220] sm:$0xff]
    %v216 = vld [vmem:[#allocation5 + $0x228] sm:$0xff]
    %v217 = vld [vmem:[#allocation5 + $0x230] sm:$0xff]
    %v218 = vld [vmem:[#allocation5 + $0x238] sm:$0xff]
    %v219 = vld [vmem:[#allocation5 + $0x240] sm:$0xff]
    %v220 = vld [vmem:[#allocation5 + $0x248] sm:$0xff]
    %v221 = vld [vmem:[#allocation5 + $0x250] sm:$0xff]
    %v222 = vld [vmem:[#allocation5 + $0x258] sm:$0xff]
    %v223 = vld [vmem:[#allocation5 + $0x260] sm:$0xff]
    %v224 = vld [vmem:[#allocation5 + $0x268] sm:$0xff]
    %v225 = vld [vmem:[#allocation5 + $0x270] sm:$0xff]
    %v226 = vld [vmem:[#allocation5 + $0x278] sm:$0xff]
    %v227 = vld [vmem:[#allocation5 + $0x280] sm:$0xff]
    %v228 = vld [vmem:[#allocation5 + $0x288] sm:$0xff]
    %v229 = vld [vmem:[#allocation5 + $0x290] sm:$0xff]
    %v230 = vld [vmem:[#allocation5 + $0x298] sm:$0xff]
    %v231 = vld [vmem:[#allocation5 + $0x2a0] sm:$0xff]
    %v232 = vld [vmem:[#allocation5 + $0x2a8] sm:$0xff]
    %v233 = vld [vmem:[#allocation5 + $0x2b0] sm:$0xff]
    %v234 = vld [vmem:[#allocation5 + $0x2b8] sm:$0xff]
    %v235 = vld [vmem:[#allocation5 + $0x2c0] sm:$0xff]
    %v236 = vld [vmem:[#allocation5 + $0x2c8] sm:$0xff]
    %v237 = vld [vmem:[#allocation5 + $0x2d0] sm:$0xff]
    %v238 = vld [vmem:[#allocation5 + $0x2d8] sm:$0xff]
    %v239 = vld [vmem:[#allocation5 + $0x2e0] sm:$0xff]
    %v240 = vld [vmem:[#allocation5 + $0x2e8] sm:$0xff]
    %v241 = vld [vmem:[#allocation5 + $0x2f0] sm:$0xff]
    %v242 = vld [vmem:[#allocation5 + $0x2f8] sm:$0xff]
    %v243 = vld [vmem:[#allocation5 + $0x300] sm:$0xff]
    %v244 = vld [vmem:[#allocation5 + $0x308] sm:$0xff]
    %v245 = vld [vmem:[#allocation5 + $0x310] sm:$0xff]
    %v246 = vld [vmem:[#allocation5 + $0x318] sm:$0xff]
    %v247 = vld [vmem:[#allocation5 + $0x320] sm:$0xff]
    %v248 = vld [vmem:[#allocation5 + $0x328] sm:$0xff]
    %v249 = vld [vmem:[#allocation5 + $0x330] sm:$0xff]
    %v250 = vld [vmem:[#allocation5 + $0x338] sm:$0xff]
    %v251 = vld [vmem:[#allocation5 + $0x340] sm:$0xff]
    %v252 = vld [vmem:[#allocation5 + $0x348] sm:$0xff]
    %v253 = vld [vmem:[#allocation5 + $0x350] sm:$0xff]
    %v254 = vld [vmem:[#allocation5 + $0x358] sm:$0xff]
    %v255 = vld [vmem:[#allocation5 + $0x360] sm:$0xff]
    %v256 = vld [vmem:[#allocation5 + $0x368] sm:$0xff]
    %v257 = vld [vmem:[#allocation5 + $0x370] sm:$0xff]
    %v258 = vld [vmem:[#allocation5 + $0x378] sm:$0xff]
    %v259 = vld [vmem:[%s2] sm:$0x3]
    %v261 = vlaneseq
    %v262 = vshrl.u32 %v261, 7
    %v263 = vsub.s32 0, %v262
    %v264 = vrot.slane %v259, %v263
    %v265 = vlaneseq
    %v266 = vshrl.u32 %v265, 7
    %v267 = vsub.s32 1, %v266
    %v268 = vrot.slane %v259, %v267
    %v335 = vunpack.c.l.b16 %v83
    %v336 = vunpack.c.h.b16 %v83
    %v337 = vunpack.c.l.b16 %v84
    %v338 = vunpack.c.h.b16 %v84
    %v339 = vunpack.c.l.b16 %v85
    %v340 = vunpack.c.h.b16 %v85
    %v341 = vunpack.c.l.b16 %v86
    %v342 = vunpack.c.l.b16 %v87
    %v343 = vunpack.c.h.b16 %v87
    %v344 = vunpack.c.l.b16 %v88
    %v345 = vunpack.c.h.b16 %v88
    %v346 = vunpack.c.l.b16 %v89
    %v347 = vunpack.c.h.b16 %v89
    %v348 = vunpack.c.l.b16 %v90
    %v349 = vunpack.c.l.b16 %v91
    %v350 = vunpack.c.h.b16 %v91
    %v351 = vunpack.c.l.b16 %v92
    %v352 = vunpack.c.h.b16 %v92
    %v353 = vunpack.c.l.b16 %v93
    %v354 = vunpack.c.h.b16 %v93
    %v355 = vunpack.c.l.b16 %v94
    %v356 = vunpack.c.l.b16 %v95
    %v357 = vunpack.c.h.b16 %v95
    %v358 = vunpack.c.l.b16 %v96
    %v359 = vunpack.c.h.b16 %v96
    %v360 = vunpack.c.l.b16 %v97
    %v361 = vunpack.c.h.b16 %v97
    %v362 = vunpack.c.l.b16 %v98
    %v363 = vunpack.c.l.b16 %v99
    %v364 = vunpack.c.h.b16 %v99
    %v365 = vunpack.c.l.b16 %v100
    %v366 = vunpack.c.h.b16 %v100
    %v367 = vunpack.c.l.b16 %v101
    %v368 = vunpack.c.h.b16 %v101
    %v369 = vunpack.c.l.b16 %v102
    %v370 = vunpack.c.l.b16 %v103
    %v371 = vunpack.c.h.b16 %v103
    %v372 = vunpack.c.l.b16 %v104
    %v373 = vunpack.c.h.b16 %v104
    %v374 = vunpack.c.l.b16 %v105
    %v375 = vunpack.c.h.b16 %v105
    %v376 = vunpack.c.l.b16 %v106
    %v377 = vunpack.c.l.b16 %v107
    %v378 = vunpack.c.h.b16 %v107
    %v379 = vunpack.c.l.b16 %v108
    %v380 = vunpack.c.h.b16 %v108
    %v381 = vunpack.c.l.b16 %v109
    %v382 = vunpack.c.h.b16 %v109
    %v383 = vunpack.c.l.b16 %v110
    %v384 = vunpack.c.l.b16 %v111
    %v385 = vunpack.c.h.b16 %v111
    %v386 = vunpack.c.l.b16 %v112
    %v387 = vunpack.c.h.b16 %v112
    %v388 = vunpack.c.l.b16 %v113
    %v389 = vunpack.c.h.b16 %v113
    %v390 = vunpack.c.l.b16 %v114
    %v391 = vunpack.c.l.b16 %v115
    %v392 = vunpack.c.h.b16 %v115
    %v393 = vunpack.c.l.b16 %v116
    %v394 = vunpack.c.h.b16 %v116
    %v395 = vunpack.c.l.b16 %v117
    %v396 = vunpack.c.h.b16 %v117
    %v397 = vunpack.c.l.b16 %v118
    %v398 = vunpack.c.l.b16 %v119
    %v399 = vunpack.c.h.b16 %v119
    %v400 = vunpack.c.l.b16 %v120
    %v401 = vunpack.c.h.b16 %v120
    %v402 = vunpack.c.l.b16 %v121
    %v403 = vunpack.c.h.b16 %v121
    %v404 = vunpack.c.l.b16 %v122
    %v405 = vunpack.c.l.b16 %v123
    %v406 = vunpack.c.h.b16 %v123
    %v407 = vunpack.c.l.b16 %v124
    %v408 = vunpack.c.h.b16 %v124
    %v409 = vunpack.c.l.b16 %v125
    %v410 = vunpack.c.h.b16 %v125
    %v411 = vunpack.c.l.b16 %v126
    %v412 = vunpack.c.l.b16 %v127
    %v413 = vunpack.c.h.b16 %v127
    %v414 = vunpack.c.l.b16 %v128
    %v415 = vunpack.c.h.b16 %v128
    %v416 = vunpack.c.l.b16 %v129
    %v417 = vunpack.c.h.b16 %v129
    %v418 = vunpack.c.l.b16 %v130
    %v419 = vunpack.c.l.b16 %v131
    %v420 = vunpack.c.h.b16 %v131
    %v421 = vunpack.c.l.b16 %v132
    %v422 = vunpack.c.h.b16 %v132
    %v423 = vunpack.c.l.b16 %v133
    %v424 = vunpack.c.h.b16 %v133
    %v425 = vunpack.c.l.b16 %v134
    %v426 = vunpack.c.l.b16 %v135
    %v427 = vunpack.c.h.b16 %v135
    %v428 = vunpack.c.l.b16 %v136
    %v429 = vunpack.c.h.b16 %v136
    %v430 = vunpack.c.l.b16 %v137
    %v431 = vunpack.c.h.b16 %v137
    %v432 = vunpack.c.l.b16 %v138
    %v433 = vunpack.c.l.b16 %v139
    %v434 = vunpack.c.h.b16 %v139
    %v435 = vunpack.c.l.b16 %v140
    %v436 = vunpack.c.h.b16 %v140
    %v437 = vunpack.c.l.b16 %v141
    %v438 = vunpack.c.h.b16 %v141
    %v439 = vunpack.c.l.b16 %v142
    %v440 = vunpack.c.l.b16 %v143
    %v441 = vunpack.c.h.b16 %v143
    %v442 = vunpack.c.l.b16 %v144
    %v443 = vunpack.c.h.b16 %v144
    %v444 = vunpack.c.l.b16 %v145
    %v445 = vunpack.c.h.b16 %v145
    %v446 = vunpack.c.l.b16 %v146
    %v447 = vpack.c.b16 %v342, %v335
    %v448 = vpack.c.b16 %v343, %v336
    %v449 = vpack.c.b16 %v344, %v337
    %v450 = vpack.c.b16 %v345, %v338
    %v451 = vpack.c.b16 %v346, %v339
    %v452 = vpack.c.b16 %v347, %v340
    %v453 = vpack.c.b16 %v348, %v341
    %v454 = vpack.c.b16 %v356, %v349
    %v455 = vpack.c.b16 %v357, %v350
    %v456 = vpack.c.b16 %v358, %v351
    %v457 = vpack.c.b16 %v359, %v352
    %v458 = vpack.c.b16 %v360, %v353
    %v459 = vpack.c.b16 %v361, %v354
    %v460 = vpack.c.b16 %v362, %v355
    %v461 = vpack.c.b16 %v370, %v363
    %v462 = vpack.c.b16 %v371, %v364
    %v463 = vpack.c.b16 %v372, %v365
    %v464 = vpack.c.b16 %v373, %v366
    %v465 = vpack.c.b16 %v374, %v367
    %v466 = vpack.c.b16 %v375, %v368
    %v467 = vpack.c.b16 %v376, %v369
    %v468 = vpack.c.b16 %v384, %v377
    %v469 = vpack.c.b16 %v385, %v378
    %v470 = vpack.c.b16 %v386, %v379
    %v471 = vpack.c.b16 %v387, %v380
    %v472 = vpack.c.b16 %v388, %v381
    %v473 = vpack.c.b16 %v389, %v382
    %v474 = vpack.c.b16 %v390, %v383
    %v475 = vpack.c.b16 %v398, %v391
    %v476 = vpack.c.b16 %v399, %v392
    %v477 = vpack.c.b16 %v400, %v393
    %v478 = vpack.c.b16 %v401, %v394
    %v479 = vpack.c.b16 %v402, %v395
    %v480 = vpack.c.b16 %v403, %v396
    %v481 = vpack.c.b16 %v404, %v397
    %v482 = vpack.c.b16 %v412, %v405
    %v483 = vpack.c.b16 %v413, %v406
    %v484 = vpack.c.b16 %v414, %v407
    %v485 = vpack.c.b16 %v415, %v408
    %v486 = vpack.c.b16 %v416, %v409
    %v487 = vpack.c.b16 %v417, %v410
    %v488 = vpack.c.b16 %v418, %v411
    %v489 = vpack.c.b16 %v426, %v419
    %v490 = vpack.c.b16 %v427, %v420
    %v491 = vpack.c.b16 %v428, %v421
    %v492 = vpack.c.b16 %v429, %v422
    %v493 = vpack.c.b16 %v430, %v423
    %v494 = vpack.c.b16 %v431, %v424
    %v495 = vpack.c.b16 %v432, %v425
    %v496 = vpack.c.b16 %v440, %v433
    %v497 = vpack.c.b16 %v441, %v434
    %v498 = vpack.c.b16 %v442, %v435
    %v499 = vpack.c.b16 %v443, %v436
    %v500 = vpack.c.b16 %v444, %v437
    %v501 = vpack.c.b16 %v445, %v438
    %v502 = vpack.c.b16 %v446, %v439
    %v671 = vunpack.c.l.b16 %v147
    %v672 = vunpack.c.h.b16 %v147
    %v673 = vunpack.c.l.b16 %v148
    %v674 = vunpack.c.h.b16 %v148
    %v675 = vunpack.c.l.b16 %v149
    %v676 = vunpack.c.h.b16 %v149
    %v677 = vunpack.c.l.b16 %v150
    %v678 = vunpack.c.h.b16 %v150
    %v679 = vunpack.c.l.b16 %v151
    %v680 = vunpack.c.h.b16 %v151
    %v681 = vunpack.c.l.b16 %v152
    %v682 = vunpack.c.h.b16 %v152
    %v683 = vunpack.c.l.b16 %v153
    %v684 = vunpack.c.h.b16 %v153
    %v685 = vunpack.c.l.b16 %v154
    %v686 = vunpack.c.h.b16 %v154
    %v687 = vunpack.c.l.b16 %v155
    %v688 = vunpack.c.h.b16 %v155
    %v689 = vunpack.c.l.b16 %v156
    %v690 = vunpack.c.h.b16 %v156
    %v691 = vunpack.c.l.b16 %v157
    %v692 = vunpack.c.h.b16 %v157
    %v693 = vunpack.c.l.b16 %v158
    %v694 = vunpack.c.h.b16 %v158
    %v695 = vunpack.c.l.b16 %v159
    %v696 = vunpack.c.h.b16 %v159
    %v697 = vunpack.c.l.b16 %v160
    %v698 = vunpack.c.h.b16 %v160
    %v699 = vunpack.c.l.b16 %v161
    %v700 = vunpack.c.h.b16 %v161
    %v701 = vunpack.c.l.b16 %v162
    %v702 = vunpack.c.h.b16 %v162
    %v703 = vunpack.c.l.b16 %v163
    %v704 = vunpack.c.h.b16 %v163
    %v705 = vunpack.c.l.b16 %v164
    %v706 = vunpack.c.h.b16 %v164
    %v707 = vunpack.c.l.b16 %v165
    %v708 = vunpack.c.h.b16 %v165
    %v709 = vunpack.c.l.b16 %v166
    %v710 = vunpack.c.h.b16 %v166
    %v711 = vunpack.c.l.b16 %v167
    %v712 = vunpack.c.h.b16 %v167
    %v713 = vunpack.c.l.b16 %v168
    %v714 = vunpack.c.h.b16 %v168
    %v715 = vunpack.c.l.b16 %v169
    %v716 = vunpack.c.h.b16 %v169
    %v717 = vunpack.c.l.b16 %v170
    %v718 = vunpack.c.h.b16 %v170
    %v719 = vunpack.c.l.b16 %v171
    %v720 = vunpack.c.h.b16 %v171
    %v721 = vunpack.c.l.b16 %v172
    %v722 = vunpack.c.h.b16 %v172
    %v723 = vunpack.c.l.b16 %v173
    %v724 = vunpack.c.h.b16 %v173
    %v725 = vunpack.c.l.b16 %v174
    %v726 = vunpack.c.h.b16 %v174
    %v727 = vunpack.c.l.b16 %v175
    %v728 = vunpack.c.h.b16 %v175
    %v729 = vunpack.c.l.b16 %v176
    %v730 = vunpack.c.h.b16 %v176
    %v731 = vunpack.c.l.b16 %v177
    %v732 = vunpack.c.h.b16 %v177
    %v733 = vunpack.c.l.b16 %v178
    %v734 = vunpack.c.h.b16 %v178
    %v735 = vunpack.c.l.b16 %v179
    %v736 = vunpack.c.h.b16 %v179
    %v737 = vunpack.c.l.b16 %v180
    %v738 = vunpack.c.h.b16 %v180
    %v739 = vunpack.c.l.b16 %v181
    %v740 = vunpack.c.h.b16 %v181
    %v741 = vunpack.c.l.b16 %v182
    %v742 = vunpack.c.h.b16 %v182
    %v743 = vunpack.c.l.b16 %v183
    %v744 = vunpack.c.h.b16 %v183
    %v745 = vunpack.c.l.b16 %v184
    %v746 = vunpack.c.h.b16 %v184
    %v747 = vunpack.c.l.b16 %v185
    %v748 = vunpack.c.h.b16 %v185
    %v749 = vunpack.c.l.b16 %v186
    %v750 = vunpack.c.h.b16 %v186
    %v751 = vunpack.c.l.b16 %v187
    %v752 = vunpack.c.h.b16 %v187
    %v753 = vunpack.c.l.b16 %v188
    %v754 = vunpack.c.h.b16 %v188
    %v755 = vunpack.c.l.b16 %v189
    %v756 = vunpack.c.h.b16 %v189
    %v757 = vunpack.c.l.b16 %v190
    %v758 = vunpack.c.h.b16 %v190
    %v759 = vunpack.c.l.b16 %v191
    %v760 = vunpack.c.h.b16 %v191
    %v761 = vunpack.c.l.b16 %v192
    %v762 = vunpack.c.h.b16 %v192
    %v763 = vunpack.c.l.b16 %v193
    %v764 = vunpack.c.h.b16 %v193
    %v765 = vunpack.c.l.b16 %v194
    %v766 = vunpack.c.h.b16 %v194
    %v767 = vunpack.c.l.b16 %v195
    %v768 = vunpack.c.h.b16 %v195
    %v769 = vunpack.c.l.b16 %v196
    %v770 = vunpack.c.h.b16 %v196
    %v771 = vunpack.c.l.b16 %v197
    %v772 = vunpack.c.h.b16 %v197
    %v773 = vunpack.c.l.b16 %v198
    %v774 = vunpack.c.h.b16 %v198
    %v775 = vunpack.c.l.b16 %v199
    %v776 = vunpack.c.h.b16 %v199
    %v777 = vunpack.c.l.b16 %v200
    %v778 = vunpack.c.h.b16 %v200
    %v779 = vunpack.c.l.b16 %v201
    %v780 = vunpack.c.h.b16 %v201
    %v781 = vunpack.c.l.b16 %v202
    %v782 = vunpack.c.h.b16 %v202
    %v783 = vunpack.c.l.b16 %v203
    %v784 = vunpack.c.h.b16 %v203
    %v785 = vunpack.c.l.b16 %v204
    %v786 = vunpack.c.h.b16 %v204
    %v787 = vunpack.c.l.b16 %v205
    %v788 = vunpack.c.h.b16 %v205
    %v789 = vunpack.c.l.b16 %v206
    %v790 = vunpack.c.h.b16 %v206
    %v791 = vunpack.c.l.b16 %v207
    %v792 = vunpack.c.h.b16 %v207
    %v793 = vunpack.c.l.b16 %v208
    %v794 = vunpack.c.h.b16 %v208
    %v795 = vunpack.c.l.b16 %v209
    %v796 = vunpack.c.h.b16 %v209
    %v797 = vunpack.c.l.b16 %v210
    %v798 = vunpack.c.h.b16 %v210
    %v799 = vunpack.c.l.b16 %v211
    %v800 = vunpack.c.h.b16 %v211
    %v801 = vunpack.c.l.b16 %v212
    %v802 = vunpack.c.h.b16 %v212
    %v803 = vunpack.c.l.b16 %v213
    %v804 = vunpack.c.h.b16 %v213
    %v805 = vunpack.c.l.b16 %v214
    %v806 = vunpack.c.h.b16 %v214
    %v807 = vunpack.c.l.b16 %v215
    %v808 = vunpack.c.h.b16 %v215
    %v809 = vunpack.c.l.b16 %v216
    %v810 = vunpack.c.h.b16 %v216
    %v811 = vunpack.c.l.b16 %v217
    %v812 = vunpack.c.h.b16 %v217
    %v813 = vunpack.c.l.b16 %v218
    %v814 = vunpack.c.h.b16 %v218
    %v815 = vunpack.c.l.b16 %v219
    %v816 = vunpack.c.h.b16 %v219
    %v817 = vunpack.c.l.b16 %v220
    %v818 = vunpack.c.h.b16 %v220
    %v819 = vunpack.c.l.b16 %v221
    %v820 = vunpack.c.h.b16 %v221
    %v821 = vunpack.c.l.b16 %v222
    %v822 = vunpack.c.h.b16 %v222
    %v823 = vunpack.c.l.b16 %v223
    %v824 = vunpack.c.h.b16 %v223
    %v825 = vunpack.c.l.b16 %v224
    %v826 = vunpack.c.h.b16 %v224
    %v827 = vunpack.c.l.b16 %v225
    %v828 = vunpack.c.h.b16 %v225
    %v829 = vunpack.c.l.b16 %v226
    %v830 = vunpack.c.h.b16 %v226
    %v831 = vunpack.c.l.b16 %v227
    %v832 = vunpack.c.h.b16 %v227
    %v833 = vunpack.c.l.b16 %v228
    %v834 = vunpack.c.h.b16 %v228
    %v835 = vunpack.c.l.b16 %v229
    %v836 = vunpack.c.h.b16 %v229
    %v837 = vunpack.c.l.b16 %v230
    %v838 = vunpack.c.h.b16 %v230
    %v839 = vunpack.c.l.b16 %v231
    %v840 = vunpack.c.h.b16 %v231
    %v841 = vunpack.c.l.b16 %v232
    %v842 = vunpack.c.h.b16 %v232
    %v843 = vunpack.c.l.b16 %v233
    %v844 = vunpack.c.h.b16 %v233
    %v845 = vunpack.c.l.b16 %v234
    %v846 = vunpack.c.h.b16 %v234
    %v847 = vunpack.c.l.b16 %v235
    %v848 = vunpack.c.h.b16 %v235
    %v849 = vunpack.c.l.b16 %v236
    %v850 = vunpack.c.h.b16 %v236
    %v851 = vunpack.c.l.b16 %v237
    %v852 = vunpack.c.h.b16 %v237
    %v853 = vunpack.c.l.b16 %v238
    %v854 = vunpack.c.h.b16 %v238
    %v855 = vunpack.c.l.b16 %v239
    %v856 = vunpack.c.h.b16 %v239
    %v857 = vunpack.c.l.b16 %v240
    %v858 = vunpack.c.h.b16 %v240
    %v859 = vunpack.c.l.b16 %v241
    %v860 = vunpack.c.h.b16 %v241
    %v861 = vunpack.c.l.b16 %v242
    %v862 = vunpack.c.h.b16 %v242
    %v863 = vunpack.c.l.b16 %v243
    %v864 = vunpack.c.h.b16 %v243
    %v865 = vunpack.c.l.b16 %v244
    %v866 = vunpack.c.h.b16 %v244
    %v867 = vunpack.c.l.b16 %v245
    %v868 = vunpack.c.h.b16 %v245
    %v869 = vunpack.c.l.b16 %v246
    %v870 = vunpack.c.h.b16 %v246
    %v871 = vunpack.c.l.b16 %v247
    %v872 = vunpack.c.h.b16 %v247
    %v873 = vunpack.c.l.b16 %v248
    %v874 = vunpack.c.h.b16 %v248
    %v875 = vunpack.c.l.b16 %v249
    %v876 = vunpack.c.h.b16 %v249
    %v877 = vunpack.c.l.b16 %v250
    %v878 = vunpack.c.h.b16 %v250
    %v879 = vunpack.c.l.b16 %v251
    %v880 = vunpack.c.h.b16 %v251
    %v881 = vunpack.c.l.b16 %v252
    %v882 = vunpack.c.h.b16 %v252
    %v883 = vunpack.c.l.b16 %v253
    %v884 = vunpack.c.h.b16 %v253
    %v885 = vunpack.c.l.b16 %v254
    %v886 = vunpack.c.h.b16 %v254
    %v887 = vunpack.c.l.b16 %v255
    %v888 = vunpack.c.h.b16 %v255
    %v889 = vunpack.c.l.b16 %v256
    %v890 = vunpack.c.h.b16 %v256
    %v891 = vunpack.c.l.b16 %v257
    %v892 = vunpack.c.h.b16 %v257
    %v893 = vunpack.c.l.b16 %v258
    %v894 = vunpack.c.h.b16 %v258
    %v895 = vpack.c.b16 %v673, %v671
    %v896 = vpack.c.b16 %v674, %v672
    %v897 = vpack.c.b16 %v677, %v675
    %v898 = vpack.c.b16 %v678, %v676
    %v899 = vpack.c.b16 %v681, %v679
    %v900 = vpack.c.b16 %v682, %v680
    %v901 = vpack.c.b16 %v685, %v683
    %v902 = vpack.c.b16 %v686, %v684
    %v903 = vpack.c.b16 %v689, %v687
    %v904 = vpack.c.b16 %v690, %v688
    %v905 = vpack.c.b16 %v693, %v691
    %v906 = vpack.c.b16 %v694, %v692
    %v907 = vpack.c.b16 %v697, %v695
    %v908 = vpack.c.b16 %v698, %v696
    %v909 = vpack.c.b16 %v701, %v699
    %v910 = vpack.c.b16 %v702, %v700
    %v911 = vpack.c.b16 %v705, %v703
    %v912 = vpack.c.b16 %v706, %v704
    %v913 = vpack.c.b16 %v709, %v707
    %v914 = vpack.c.b16 %v710, %v708
    %v915 = vpack.c.b16 %v713, %v711
    %v916 = vpack.c.b16 %v714, %v712
    %v917 = vpack.c.b16 %v717, %v715
    %v918 = vpack.c.b16 %v718, %v716
    %v919 = vpack.c.b16 %v721, %v719
    %v920 = vpack.c.b16 %v722, %v720
    %v921 = vpack.c.b16 %v725, %v723
    %v922 = vpack.c.b16 %v726, %v724
    %v923 = vpack.c.b16 %v729, %v727
    %v924 = vpack.c.b16 %v730, %v728
    %v925 = vpack.c.b16 %v733, %v731
    %v926 = vpack.c.b16 %v734, %v732
    %v927 = vpack.c.b16 %v737, %v735
    %v928 = vpack.c.b16 %v738, %v736
    %v929 = vpack.c.b16 %v741, %v739
    %v930 = vpack.c.b16 %v742, %v740
    %v931 = vpack.c.b16 %v745, %v743
    %v932 = vpack.c.b16 %v746, %v744
    %v933 = vpack.c.b16 %v749, %v747
    %v934 = vpack.c.b16 %v750, %v748
    %v935 = vpack.c.b16 %v753, %v751
    %v936 = vpack.c.b16 %v754, %v752
    %v937 = vpack.c.b16 %v757, %v755
    %v938 = vpack.c.b16 %v758, %v756
    %v939 = vpack.c.b16 %v761, %v759
    %v940 = vpack.c.b16 %v762, %v760
    %v941 = vpack.c.b16 %v765, %v763
    %v942 = vpack.c.b16 %v766, %v764
    %v943 = vpack.c.b16 %v769, %v767
    %v944 = vpack.c.b16 %v770, %v768
    %v945 = vpack.c.b16 %v773, %v771
    %v946 = vpack.c.b16 %v774, %v772
    %v947 = vpack.c.b16 %v777, %v775
    %v948 = vpack.c.b16 %v778, %v776
    %v949 = vpack.c.b16 %v781, %v779
    %v950 = vpack.c.b16 %v782, %v780
    %v951 = vpack.c.b16 %v785, %v783
    %v952 = vpack.c.b16 %v786, %v784
    %v953 = vpack.c.b16 %v789, %v787
    %v954 = vpack.c.b16 %v790, %v788
    %v955 = vpack.c.b16 %v793, %v791
    %v956 = vpack.c.b16 %v794, %v792
    %v957 = vpack.c.b16 %v797, %v795
    %v958 = vpack.c.b16 %v798, %v796
    %v959 = vpack.c.b16 %v801, %v799
    %v960 = vpack.c.b16 %v802, %v800
    %v961 = vpack.c.b16 %v805, %v803
    %v962 = vpack.c.b16 %v806, %v804
    %v963 = vpack.c.b16 %v809, %v807
    %v964 = vpack.c.b16 %v810, %v808
    %v965 = vpack.c.b16 %v813, %v811
    %v966 = vpack.c.b16 %v814, %v812
    %v967 = vpack.c.b16 %v817, %v815
    %v968 = vpack.c.b16 %v818, %v816
    %v969 = vpack.c.b16 %v821, %v819
    %v970 = vpack.c.b16 %v822, %v820
    %v971 = vpack.c.b16 %v825, %v823
    %v972 = vpack.c.b16 %v826, %v824
    %v973 = vpack.c.b16 %v829, %v827
    %v974 = vpack.c.b16 %v830, %v828
    %v975 = vpack.c.b16 %v833, %v831
    %v976 = vpack.c.b16 %v834, %v832
    %v977 = vpack.c.b16 %v837, %v835
    %v978 = vpack.c.b16 %v838, %v836
    %v979 = vpack.c.b16 %v841, %v839
    %v980 = vpack.c.b16 %v842, %v840
    %v981 = vpack.c.b16 %v845, %v843
    %v982 = vpack.c.b16 %v846, %v844
    %v983 = vpack.c.b16 %v849, %v847
    %v984 = vpack.c.b16 %v850, %v848
    %v985 = vpack.c.b16 %v853, %v851
    %v986 = vpack.c.b16 %v854, %v852
    %v987 = vpack.c.b16 %v857, %v855
    %v988 = vpack.c.b16 %v858, %v856
    %v989 = vpack.c.b16 %v861, %v859
    %v990 = vpack.c.b16 %v862, %v860
    %v991 = vpack.c.b16 %v865, %v863
    %v992 = vpack.c.b16 %v866, %v864
    %v993 = vpack.c.b16 %v869, %v867
    %v994 = vpack.c.b16 %v870, %v868
    %v995 = vpack.c.b16 %v873, %v871
    %v996 = vpack.c.b16 %v874, %v872
    %v997 = vpack.c.b16 %v877, %v875
    %v998 = vpack.c.b16 %v878, %v876
    %v999 = vpack.c.b16 %v881, %v879
    %v1000 = vpack.c.b16 %v882, %v880
    %v1001 = vpack.c.b16 %v885, %v883
    %v1002 = vpack.c.b16 %v886, %v884
    %v1003 = vpack.c.b16 %v889, %v887
    %v1004 = vpack.c.b16 %v890, %v888
    %v1005 = vpack.c.b16 %v893, %v891
    %v1006 = vpack.c.b16 %v894, %v892
    %1119 = vmatprep.subr.bf16.mxu0 %v896
    %1120 = vmatpush1.bf16.msra.mxu0 %v895
    %1121 = vmatprep.subr.bf16.mxu0 %v898
    %1122 = vmatpush1.bf16.msra.mxu0 %v897
    %1123 = vmatprep.subr.bf16.mxu0 %v900
    %1124 = vmatpush1.bf16.msra.mxu0 %v899
    %1125 = vmatprep.subr.bf16.mxu0 %v902
    %1126 = vmatpush1.bf16.msra.mxu0 %v901
    %1127 = vmatprep.subr.bf16.mxu0 %v904
    %1128 = vmatpush1.bf16.msra.mxu0 %v903
    %1129 = vmatprep.subr.bf16.mxu0 %v906
    %1130 = vmatpush1.bf16.msra.mxu0 %v905
    %1131 = vmatprep.subr.bf16.mxu0 %v908
    %1132 = vmatpush1.bf16.msra.mxu0 %v907
    %1133 = vmatprep.subr.bf16.mxu0 %v910
    %1134 = vmatpush1.bf16.msra.mxu0 %v909
    %1135 = vmatprep.subr.bf16.mxu0 %v912
    %1136 = vmatpush1.bf16.msra.mxu0 %v911
    %1137 = vmatprep.subr.bf16.mxu0 %v914
    %1138 = vmatpush1.bf16.msra.mxu0 %v913
    %1139 = vmatprep.subr.bf16.mxu0 %v916
    %1140 = vmatpush1.bf16.msra.mxu0 %v915
    %1141 = vmatprep.subr.bf16.mxu0 %v918
    %1142 = vmatpush1.bf16.msra.mxu0 %v917
    %1143 = vmatprep.subr.bf16.mxu0 %v920
    %1144 = vmatpush1.bf16.msra.mxu0 %v919
    %1145 = vmatprep.subr.bf16.mxu0 %v922
    %1146 = vmatpush1.bf16.msra.mxu0 %v921
    %1147 = vmatprep.subr.bf16.mxu0 %v924
    %1148 = vmatpush1.bf16.msra.mxu0 %v923
    %1149 = vmatprep.subr.bf16.mxu0 %v926
    %1150 = vmatpush1.bf16.msra.mxu0 %v925
    %1151 = vmatprep.mubr.bf16.mxu0 %v448
    %1152 = vmatmul.mubr.bf16.gmra.mrb[0].mxu0 %v447
    %v1153 = vpop.f32.mrb[0].mxu0
    %v1154 = vadd.f32 %v264, %v1153
    %v1155 = vpop.f32.mrb[0].mxu0
    %v1156 = vadd.f32 %v268, %v1155
    %v1157 = vpop.f32.mrb[0].mxu0
    %v1158 = vadd.f32 %v264, %v1157
    %v1159 = vpop.f32.mrb[0].mxu0
    %v1160 = vadd.f32 %v268, %v1159
    %1161 = vmatprep.mubr.bf16.mxu0 %v455
    %1162 = vmatmul.mubr.bf16.gmra.mrb[0].mxu0 %v454
    %v1163 = vpop.f32.mrb[0].mxu0
    %v1164 = vadd.f32 %v264, %v1163
    %v1165 = vpop.f32.mrb[0].mxu0
    %v1166 = vadd.f32 %v268, %v1165
    %v1167 = vpop.f32.mrb[0].mxu0
    %v1168 = vadd.f32 %v264, %v1167
    %v1169 = vpop.f32.mrb[0].mxu0
    %v1170 = vadd.f32 %v268, %v1169
    %1171 = vmatprep.mubr.bf16.mxu0 %v462
    %1172 = vmatmul.mubr.bf16.gmra.mrb[0].mxu0 %v461
    %v1173 = vpop.f32.mrb[0].mxu0
    %v1174 = vadd.f32 %v264, %v1173
    %v1175 = vpop.f32.mrb[0].mxu0
    %v1176 = vadd.f32 %v268, %v1175
    %v1177 = vpop.f32.mrb[0].mxu0
    %v1178 = vadd.f32 %v264, %v1177
    %v1179 = vpop.f32.mrb[0].mxu0
    %v1180 = vadd.f32 %v268, %v1179
    %1181 = vmatprep.mubr.bf16.mxu0 %v469
    %1182 = vmatmul.mubr.bf16.gmra.mrb[0].mxu0 %v468
    %v1183 = vpop.f32.mrb[0].mxu0
    %v1184 = vadd.f32 %v264, %v1183
    %v1185 = vpop.f32.mrb[0].mxu0
    %v1186 = vadd.f32 %v268, %v1185
    %v1187 = vpop.f32.mrb[0].mxu0
    %v1188 = vadd.f32 %v264, %v1187
    %v1189 = vpop.f32.mrb[0].mxu0
    %v1190 = vadd.f32 %v268, %v1189
    %1191 = vmatprep.mubr.bf16.mxu0 %v476
    %1192 = vmatmul.mubr.bf16.gmra.mrb[0].mxu0 %v475
    %v1193 = vpop.f32.mrb[0].mxu0
    %v1194 = vadd.f32 %v264, %v1193
    %v1195 = vpop.f32.mrb[0].mxu0
    %v1196 = vadd.f32 %v268, %v1195
    %v1197 = vpop.f32.mrb[0].mxu0
    %v1198 = vadd.f32 %v264, %v1197
    %v1199 = vpop.f32.mrb[0].mxu0
    %v1200 = vadd.f32 %v268, %v1199
    %1201 = vmatprep.mubr.bf16.mxu0 %v483
    %1202 = vmatmul.mubr.bf16.gmra.mrb[0].mxu0 %v482
    %v1203 = vpop.f32.mrb[0].mxu0
    %v1204 = vadd.f32 %v264, %v1203
    %v1205 = vpop.f32.mrb[0].mxu0
    %v1206 = vadd.f32 %v268, %v1205
    %v1207 = vpop.f32.mrb[0].mxu0
    %v1208 = vadd.f32 %v264, %v1207
    %v1209 = vpop.f32.mrb[0].mxu0
    %v1210 = vadd.f32 %v268, %v1209
    %1211 = vmatprep.mubr.bf16.mxu0 %v490
    %1212 = vmatmul.mubr.bf16.gmra.mrb[0].mxu0 %v489
    %v1213 = vpop.f32.mrb[0].mxu0
    %v1214 = vadd.f32 %v264, %v1213
    %v1215 = vpop.f32.mrb[0].mxu0
    %v1216 = vadd.f32 %v268, %v1215
    %v1217 = vpop.f32.mrb[0].mxu0
    %v1218 = vadd.f32 %v264, %v1217
    %v1219 = vpop.f32.mrb[0].mxu0
    %v1220 = vadd.f32 %v268, %v1219
    %1221 = vmatprep.mubr.bf16.mxu0 %v497
    %1222 = vmatmul.mubr.bf16.gmra.mrb[0].mxu0 %v496
    %v1223 = vpop.f32.mrb[0].mxu0
    %v1224 = vadd.f32 %v264, %v1223
    %v1225 = vpop.f32.mrb[0].mxu0
    %v1226 = vadd.f32 %v268, %v1225
    %v1227 = vpop.f32.mrb[0].mxu0
    %v1228 = vadd.f32 %v264, %v1227
    %v1229 = vpop.f32.mrb[0].mxu0
    %v1230 = vadd.f32 %v268, %v1229
    %1231 = vdwg.mxu0
    %1232 = vmatprep.subr.bf16.mxu0 %v928
    %1233 = vmatpush1.bf16.msra.mxu0 %v927
    %1234 = vmatprep.subr.bf16.mxu0 %v930
    %1235 = vmatpush1.bf16.msra.mxu0 %v929
    %1236 = vmatprep.subr.bf16.mxu0 %v932
    %1237 = vmatpush1.bf16.msra.mxu0 %v931
    %1238 = vmatprep.subr.bf16.mxu0 %v934
    %1239 = vmatpush1.bf16.msra.mxu0 %v933
    %1240 = vmatprep.subr.bf16.mxu0 %v936
    %1241 = vmatpush1.bf16.msra.mxu0 %v935
    %1242 = vmatprep.subr.bf16.mxu0 %v938
    %1243 = vmatpush1.bf16.msra.mxu0 %v937
    %1244 = vmatprep.subr.bf16.mxu0 %v940
    %1245 = vmatpush1.bf16.msra.mxu0 %v939
    %1246 = vmatprep.subr.bf16.mxu0 %v942
    %1247 = vmatpush1.bf16.msra.mxu0 %v941
    %1248 = vmatprep.subr.bf16.mxu0 %v944
    %1249 = vmatpush1.bf16.msra.mxu0 %v943
    %1250 = vmatprep.subr.bf16.mxu0 %v946
    %1251 = vmatpush1.bf16.msra.mxu0 %v945
    %1252 = vmatprep.subr.bf16.mxu0 %v948
    %1253 = vmatpush1.bf16.msra.mxu0 %v947
    %1254 = vmatprep.subr.bf16.mxu0 %v950
    %1255 = vmatpush1.bf16.msra.mxu0 %v949
    %1256 = vmatprep.subr.bf16.mxu0 %v952
    %1257 = vmatpush1.bf16.msra.mxu0 %v951
    %1258 = vmatprep.subr.bf16.mxu0 %v954
    %1259 = vmatpush1.bf16.msra.mxu0 %v953
    %1260 = vmatprep.subr.bf16.mxu0 %v956
    %1261 = vmatpush1.bf16.msra.mxu0 %v955
    %1262 = vmatprep.subr.bf16.mxu0 %v958
    %1263 = vmatpush1.bf16.msra.mxu0 %v957
    %1264 = vmatprep.mubr.bf16.mxu0 %v450
    %1265 = vmatmul.mubr.bf16.gmra.mrb[0].mxu0 %v449
    %v1266 = vpop.f32.mrb[0].mxu0
    %v1267 = vadd.f32 %v1154, %v1266
    %v1268 = vpop.f32.mrb[0].mxu0
    %v1269 = vadd.f32 %v1156, %v1268
    %v1270 = vpop.f32.mrb[0].mxu0
    %v1271 = vadd.f32 %v1158, %v1270
    %v1272 = vpop.f32.mrb[0].mxu0
    %v1273 = vadd.f32 %v1160, %v1272
    %1274 = vmatprep.mubr.bf16.mxu0 %v457
    %1275 = vmatmul.mubr.bf16.gmra.mrb[0].mxu0 %v456
    %v1276 = vpop.f32.mrb[0].mxu0
    %v1277 = vadd.f32 %v1164, %v1276
    %v1278 = vpop.f32.mrb[0].mxu0
    %v1279 = vadd.f32 %v1166, %v1278
    %v1280 = vpop.f32.mrb[0].mxu0
    %v1281 = vadd.f32 %v1168, %v1280
    %v1282 = vpop.f32.mrb[0].mxu0
    %v1283 = vadd.f32 %v1170, %v1282
    %1284 = vmatprep.mubr.bf16.mxu0 %v464
    %1285 = vmatmul.mubr.bf16.gmra.mrb[0].mxu0 %v463
    %v1286 = vpop.f32.mrb[0].mxu0
    %v1287 = vadd.f32 %v1174, %v1286
    %v1288 = vpop.f32.mrb[0].mxu0
    %v1289 = vadd.f32 %v1176, %v1288
    %v1290 = vpop.f32.mrb[0].mxu0
    %v1291 = vadd.f32 %v1178, %v1290
    %v1292 = vpop.f32.mrb[0].mxu0
    %v1293 = vadd.f32 %v1180, %v1292
    %1294 = vmatprep.mubr.bf16.mxu0 %v471
    %1295 = vmatmul.mubr.bf16.gmra.mrb[0].mxu0 %v470
    %v1296 = vpop.f32.mrb[0].mxu0
    %v1297 = vadd.f32 %v1184, %v1296
    %v1298 = vpop.f32.mrb[0].mxu0
    %v1299 = vadd.f32 %v1186, %v1298
    %v1300 = vpop.f32.mrb[0].mxu0
    %v1301 = vadd.f32 %v1188, %v1300
    %v1302 = vpop.f32.mrb[0].mxu0
    %v1303 = vadd.f32 %v1190, %v1302
    %1304 = vmatprep.mubr.bf16.mxu0 %v478
    %1305 = vmatmul.mubr.bf16.gmra.mrb[0].mxu0 %v477
    %v1306 = vpop.f32.mrb[0].mxu0
    %v1307 = vadd.f32 %v1194, %v1306
    %v1308 = vpop.f32.mrb[0].mxu0
    %v1309 = vadd.f32 %v1196, %v1308
    %v1310 = vpop.f32.mrb[0].mxu0
    %v1311 = vadd.f32 %v1198, %v1310
    %v1312 = vpop.f32.mrb[0].mxu0
    %v1313 = vadd.f32 %v1200, %v1312
    %1314 = vmatprep.mubr.bf16.mxu0 %v485
    %1315 = vmatmul.mubr.bf16.gmra.mrb[0].mxu0 %v484
    %v1316 = vpop.f32.mrb[0].mxu0
    %v1317 = vadd.f32 %v1204, %v1316
    %v1318 = vpop.f32.mrb[0].mxu0
    %v1319 = vadd.f32 %v1206, %v1318
    %v1320 = vpop.f32.mrb[0].mxu0
    %v1321 = vadd.f32 %v1208, %v1320
    %v1322 = vpop.f32.mrb[0].mxu0
    %v1323 = vadd.f32 %v1210, %v1322
    %1324 = vmatprep.mubr.bf16.mxu0 %v492
    %1325 = vmatmul.mubr.bf16.gmra.mrb[0].mxu0 %v491
    %v1326 = vpop.f32.mrb[0].mxu0
    %v1327 = vadd.f32 %v1214, %v1326
    %v1328 = vpop.f32.mrb[0].mxu0
    %v1329 = vadd.f32 %v1216, %v1328
    %v1330 = vpop.f32.mrb[0].mxu0
    %v1331 = vadd.f32 %v1218, %v1330
    %v1332 = vpop.f32.mrb[0].mxu0
    %v1333 = vadd.f32 %v1220, %v1332
    %1334 = vmatprep.mubr.bf16.mxu0 %v499
    %1335 = vmatmul.mubr.bf16.gmra.mrb[0].mxu0 %v498
    %v1336 = vpop.f32.mrb[0].mxu0
    %v1337 = vadd.f32 %v1224, %v1336
    %v1338 = vpop.f32.mrb[0].mxu0
    %v1339 = vadd.f32 %v1226, %v1338
    %v1340 = vpop.f32.mrb[0].mxu0
    %v1341 = vadd.f32 %v1228, %v1340
    %v1342 = vpop.f32.mrb[0].mxu0
    %v1343 = vadd.f32 %v1230, %v1342
    %1344 = vdwg.mxu0
    %1345 = vmatprep.subr.bf16.mxu0 %v960
    %1346 = vmatpush1.bf16.msra.mxu0 %v959
    %1347 = vmatprep.subr.bf16.mxu0 %v962
    %1348 = vmatpush1.bf16.msra.mxu0 %v961
    %1349 = vmatprep.subr.bf16.mxu0 %v964
    %1350 = vmatpush1.bf16.msra.mxu0 %v963
    %1351 = vmatprep.subr.bf16.mxu0 %v966
    %1352 = vmatpush1.bf16.msra.mxu0 %v965
    %1353 = vmatprep.subr.bf16.mxu0 %v968
    %1354 = vmatpush1.bf16.msra.mxu0 %v967
    %1355 = vmatprep.subr.bf16.mxu0 %v970
    %1356 = vmatpush1.bf16.msra.mxu0 %v969
    %1357 = vmatprep.subr.bf16.mxu0 %v972
    %1358 = vmatpush1.bf16.msra.mxu0 %v971
    %1359 = vmatprep.subr.bf16.mxu0 %v974
    %1360 = vmatpush1.bf16.msra.mxu0 %v973
    %1361 = vmatprep.subr.bf16.mxu0 %v976
    %1362 = vmatpush1.bf16.msra.mxu0 %v975
    %1363 = vmatprep.subr.bf16.mxu0 %v978
    %1364 = vmatpush1.bf16.msra.mxu0 %v977
    %1365 = vmatprep.subr.bf16.mxu0 %v980
    %1366 = vmatpush1.bf16.msra.mxu0 %v979
    %1367 = vmatprep.subr.bf16.mxu0 %v982
    %1368 = vmatpush1.bf16.msra.mxu0 %v981
    %1369 = vmatprep.subr.bf16.mxu0 %v984
    %1370 = vmatpush1.bf16.msra.mxu0 %v983
    %1371 = vmatprep.subr.bf16.mxu0 %v986
    %1372 = vmatpush1.bf16.msra.mxu0 %v985
    %1373 = vmatprep.subr.bf16.mxu0 %v988
    %1374 = vmatpush1.bf16.msra.mxu0 %v987
    %1375 = vmatprep.subr.bf16.mxu0 %v990
    %1376 = vmatpush1.bf16.msra.mxu0 %v989
    %1377 = vmatprep.mubr.bf16.mxu0 %v452
    %1378 = vmatmul.mubr.bf16.gmra.mrb[0].mxu0 %v451
    %v1379 = vpop.f32.mrb[0].mxu0
    %v1380 = vadd.f32 %v1267, %v1379
    %v1381 = vpop.f32.mrb[0].mxu0
    %v1382 = vadd.f32 %v1269, %v1381
    %v1383 = vpop.f32.mrb[0].mxu0
    %v1384 = vadd.f32 %v1271, %v1383
    %v1385 = vpop.f32.mrb[0].mxu0
    %v1386 = vadd.f32 %v1273, %v1385
    %1387 = vmatprep.mubr.bf16.mxu0 %v459
    %1388 = vmatmul.mubr.bf16.gmra.mrb[0].mxu0 %v458
    %v1389 = vpop.f32.mrb[0].mxu0
    %v1390 = vadd.f32 %v1277, %v1389
    %v1391 = vpop.f32.mrb[0].mxu0
    %v1392 = vadd.f32 %v1279, %v1391
    %v1393 = vpop.f32.mrb[0].mxu0
    %v1394 = vadd.f32 %v1281, %v1393
    %v1395 = vpop.f32.mrb[0].mxu0
    %v1396 = vadd.f32 %v1283, %v1395
    %1397 = vmatprep.mubr.bf16.mxu0 %v466
    %1398 = vmatmul.mubr.bf16.gmra.mrb[0].mxu0 %v465
    %v1399 = vpop.f32.mrb[0].mxu0
    %v1400 = vadd.f32 %v1287, %v1399
    %v1401 = vpop.f32.mrb[0].mxu0
    %v1402 = vadd.f32 %v1289, %v1401
    %v1403 = vpop.f32.mrb[0].mxu0
    %v1404 = vadd.f32 %v1291, %v1403
    %v1405 = vpop.f32.mrb[0].mxu0
    %v1406 = vadd.f32 %v1293, %v1405
    %1407 = vmatprep.mubr.bf16.mxu0 %v473
    %1408 = vmatmul.mubr.bf16.gmra.mrb[0].mxu0 %v472
    %v1409 = vpop.f32.mrb[0].mxu0
    %v1410 = vadd.f32 %v1297, %v1409
    %v1411 = vpop.f32.mrb[0].mxu0
    %v1412 = vadd.f32 %v1299, %v1411
    %v1413 = vpop.f32.mrb[0].mxu0
    %v1414 = vadd.f32 %v1301, %v1413
    %v1415 = vpop.f32.mrb[0].mxu0
    %v1416 = vadd.f32 %v1303, %v1415
    %1417 = vmatprep.mubr.bf16.mxu0 %v480
    %1418 = vmatmul.mubr.bf16.gmra.mrb[0].mxu0 %v479
    %v1419 = vpop.f32.mrb[0].mxu0
    %v1420 = vadd.f32 %v1307, %v1419
    %v1421 = vpop.f32.mrb[0].mxu0
    %v1422 = vadd.f32 %v1309, %v1421
    %v1423 = vpop.f32.mrb[0].mxu0
    %v1424 = vadd.f32 %v1311, %v1423
    %v1425 = vpop.f32.mrb[0].mxu0
    %v1426 = vadd.f32 %v1313, %v1425
    %1427 = vmatprep.mubr.bf16.mxu0 %v487
    %1428 = vmatmul.mubr.bf16.gmra.mrb[0].mxu0 %v486
    %v1429 = vpop.f32.mrb[0].mxu0
    %v1430 = vadd.f32 %v1317, %v1429
    %v1431 = vpop.f32.mrb[0].mxu0
    %v1432 = vadd.f32 %v1319, %v1431
    %v1433 = vpop.f32.mrb[0].mxu0
    %v1434 = vadd.f32 %v1321, %v1433
    %v1435 = vpop.f32.mrb[0].mxu0
    %v1436 = vadd.f32 %v1323, %v1435
    %1437 = vmatprep.mubr.bf16.mxu0 %v494
    %1438 = vmatmul.mubr.bf16.gmra.mrb[0].mxu0 %v493
    %v1439 = vpop.f32.mrb[0].mxu0
    %v1440 = vadd.f32 %v1327, %v1439
    %v1441 = vpop.f32.mrb[0].mxu0
    %v1442 = vadd.f32 %v1329, %v1441
    %v1443 = vpop.f32.mrb[0].mxu0
    %v1444 = vadd.f32 %v1331, %v1443
    %v1445 = vpop.f32.mrb[0].mxu0
    %v1446 = vadd.f32 %v1333, %v1445
    %1447 = vmatprep.mubr.bf16.mxu0 %v501
    %1448 = vmatmul.mubr.bf16.gmra.mrb[0].mxu0 %v500
    %v1449 = vpop.f32.mrb[0].mxu0
    %v1450 = vadd.f32 %v1337, %v1449
    %v1451 = vpop.f32.mrb[0].mxu0
    %v1452 = vadd.f32 %v1339, %v1451
    %v1453 = vpop.f32.mrb[0].mxu0
    %v1454 = vadd.f32 %v1341, %v1453
    %v1455 = vpop.f32.mrb[0].mxu0
    %v1456 = vadd.f32 %v1343, %v1455
    %1457 = vdwg.mxu0
    %1458 = vmatprep.subr.bf16.mxu0 %v992
    %1459 = vmatpush1.bf16.msra.mxu0 %v991
    %1460 = vmatprep.subr.bf16.mxu0 %v994
    %1461 = vmatpush1.bf16.msra.mxu0 %v993
    %1462 = vmatprep.subr.bf16.mxu0 %v996
    %1463 = vmatpush1.bf16.msra.mxu0 %v995
    %1464 = vmatprep.subr.bf16.mxu0 %v998
    %1465 = vmatpush1.bf16.msra.mxu0 %v997
    %1466 = vmatprep.subr.bf16.mxu0 %v1000
    %1467 = vmatpush1.bf16.msra.mxu0 %v999
    %1468 = vmatprep.subr.bf16.mxu0 %v1002
    %1469 = vmatpush1.bf16.msra.mxu0 %v1001
    %1470 = vmatprep.subr.bf16.mxu0 %v1004
    %1471 = vmatpush1.bf16.msra.mxu0 %v1003
    %1472 = vmatprep.subr.bf16.mxu0 %v1006
    %1473 = vmatpush1.bf16.msra.mxu0 %v1005
    %1474 = vmatprep.subr.bf16.mxu0 0
    %1475 = vmatpush1.bf16.msra.mxu0 0
    %1476 = vmatprep.subr.bf16.mxu0 0
    %1477 = vmatpush1.bf16.msra.mxu0 0
    %1478 = vmatprep.subr.bf16.mxu0 0
    %1479 = vmatpush1.bf16.msra.mxu0 0
    %1480 = vmatprep.subr.bf16.mxu0 0
    %1481 = vmatpush1.bf16.msra.mxu0 0
    %1482 = vmatprep.subr.bf16.mxu0 0
    %1483 = vmatpush1.bf16.msra.mxu0 0
    %1484 = vmatprep.subr.bf16.mxu0 0
    %1485 = vmatpush1.bf16.msra.mxu0 0
    %1486 = vmatprep.subr.bf16.mxu0 0
    %1487 = vmatpush1.bf16.msra.mxu0 0
    %1488 = vmatprep.subr.bf16.mxu0 0
    %1489 = vmatpush1.bf16.msra.mxu0 0
    %1490 = vmatprep.mubr.bf16.mxu0 0
    %1491 = vmatmul.mubr.bf16.gmra.mrb[0].mxu0 %v453
    %v1492 = vpop.f32.mrb[0].mxu0
    %v1493 = vadd.f32 %v1380, %v1492
    %v1494 = vpop.f32.mrb[0].mxu0
    %v1495 = vadd.f32 %v1382, %v1494
    %v1496 = vpop.f32.mrb[0].mxu0
    %v1497 = vadd.f32 %v1384, %v1496
    %v1498 = vpop.f32.mrb[0].mxu0
    %v1499 = vadd.f32 %v1386, %v1498
    %1500 = vmatprep.mubr.bf16.mxu0 0
    %1501 = vmatmul.mubr.bf16.gmra.mrb[0].mxu0 %v460
    %v1502 = vpop.f32.mrb[0].mxu0
    %v1503 = vadd.f32 %v1390, %v1502
    %v1504 = vpop.f32.mrb[0].mxu0
    %v1505 = vadd.f32 %v1392, %v1504
    %v1506 = vpop.f32.mrb[0].mxu0
    %v1507 = vadd.f32 %v1394, %v1506
    %v1508 = vpop.f32.mrb[0].mxu0
    %v1509 = vadd.f32 %v1396, %v1508
    %1510 = vmatprep.mubr.bf16.mxu0 0
    %1511 = vmatmul.mubr.bf16.gmra.mrb[0].mxu0 %v467
    %v1512 = vpop.f32.mrb[0].mxu0
    %v1513 = vadd.f32 %v1400, %v1512
    %v1514 = vpop.f32.mrb[0].mxu0
    %v1515 = vadd.f32 %v1402, %v1514
    %v1516 = vpop.f32.mrb[0].mxu0
    %v1517 = vadd.f32 %v1404, %v1516
    %v1518 = vpop.f32.mrb[0].mxu0
    %v1519 = vadd.f32 %v1406, %v1518
    %1520 = vmatprep.mubr.bf16.mxu0 0
    %1521 = vmatmul.mubr.bf16.gmra.mrb[0].mxu0 %v474
    %v1522 = vpop.f32.mrb[0].mxu0
    %v1523 = vadd.f32 %v1410, %v1522
    %v1524 = vpop.f32.mrb[0].mxu0
    %v1525 = vadd.f32 %v1412, %v1524
    %v1526 = vpop.f32.mrb[0].mxu0
    %v1527 = vadd.f32 %v1414, %v1526
    %v1528 = vpop.f32.mrb[0].mxu0
    %v1529 = vadd.f32 %v1416, %v1528
    %1530 = vmatprep.mubr.bf16.mxu0 0
    %1531 = vmatmul.mubr.bf16.gmra.mrb[0].mxu0 %v481
    %v1532 = vpop.f32.mrb[0].mxu0
    %v1533 = vadd.f32 %v1420, %v1532
    %v1534 = vpop.f32.mrb[0].mxu0
    %v1535 = vadd.f32 %v1422, %v1534
    %v1536 = vpop.f32.mrb[0].mxu0
    %v1537 = vadd.f32 %v1424, %v1536
    %v1538 = vpop.f32.mrb[0].mxu0
    %v1539 = vadd.f32 %v1426, %v1538
    %1540 = vmatprep.mubr.bf16.mxu0 0
    %1541 = vmatmul.mubr.bf16.gmra.mrb[0].mxu0 %v488
    %v1542 = vpop.f32.mrb[0].mxu0
    %v1543 = vadd.f32 %v1430, %v1542
    %v1544 = vpop.f32.mrb[0].mxu0
    %v1545 = vadd.f32 %v1432, %v1544
    %v1546 = vpop.f32.mrb[0].mxu0
    %v1547 = vadd.f32 %v1434, %v1546
    %v1548 = vpop.f32.mrb[0].mxu0
    %v1549 = vadd.f32 %v1436, %v1548
    %1550 = vmatprep.mubr.bf16.mxu0 0
    %1551 = vmatmul.mubr.bf16.gmra.mrb[0].mxu0 %v495
    %v1552 = vpop.f32.mrb[0].mxu0
    %v1553 = vadd.f32 %v1440, %v1552
    %v1554 = vpop.f32.mrb[0].mxu0
    %v1555 = vadd.f32 %v1442, %v1554
    %v1556 = vpop.f32.mrb[0].mxu0
    %v1557 = vadd.f32 %v1444, %v1556
    %v1558 = vpop.f32.mrb[0].mxu0
    %v1559 = vadd.f32 %v1446, %v1558
    %1560 = vmatprep.mubr.bf16.mxu0 0
    %1561 = vmatmul.mubr.bf16.gmra.mrb[0].mxu0 %v502
    %v1562 = vpop.f32.mrb[0].mxu0
    %v1563 = vadd.f32 %v1450, %v1562
    %v1564 = vpop.f32.mrb[0].mxu0
    %v1565 = vadd.f32 %v1452, %v1564
    %v1566 = vpop.f32.mrb[0].mxu0
    %v1567 = vadd.f32 %v1454, %v1566
    %v1568 = vpop.f32.mrb[0].mxu0
    %v1569 = vadd.f32 %v1456, %v1568
    %1570 = vdwg.mxu0
    %v1571 = vmax.f32 %v1493, 0.0
    %v1572 = vmax.f32 %v1495, 0.0
    %v1573 = vmax.f32 %v1497, 0.0
    %v1574 = vmax.f32 %v1499, 0.0
    %v1575 = vmax.f32 %v1503, 0.0
    %v1576 = vmax.f32 %v1505, 0.0
    %v1577 = vmax.f32 %v1507, 0.0
    %v1578 = vmax.f32 %v1509, 0.0
    %v1579 = vmax.f32 %v1513, 0.0
    %v1580 = vmax.f32 %v1515, 0.0
    %v1581 = vmax.f32 %v1517, 0.0
    %v1582 = vmax.f32 %v1519, 0.0
    %v1583 = vmax.f32 %v1523, 0.0
    %v1584 = vmax.f32 %v1525, 0.0
    %v1585 = vmax.f32 %v1527, 0.0
    %v1586 = vmax.f32 %v1529, 0.0
    %v1587 = vmax.f32 %v1533, 0.0
    %v1588 = vmax.f32 %v1535, 0.0
    %v1589 = vmax.f32 %v1537, 0.0
    %v1590 = vmax.f32 %v1539, 0.0
    %v1591 = vmax.f32 %v1543, 0.0
    %v1592 = vmax.f32 %v1545, 0.0
    %v1593 = vmax.f32 %v1547, 0.0
    %v1594 = vmax.f32 %v1549, 0.0
    %v1595 = vmax.f32 %v1553, 0.0
    %v1596 = vmax.f32 %v1555, 0.0
    %v1597 = vmax.f32 %v1557, 0.0
    %v1598 = vmax.f32 %v1559, 0.0
    %v1599 = vmax.f32 %v1563, 0.0
    %v1600 = vmax.f32 %v1565, 0.0
    %v1601 = vmax.f32 %v1567, 0.0
    %v1602 = vmax.f32 %v1569, 0.0
    %v1603 = vpack.c.bf16 %v1573, %v1571
    %v1604 = vpack.c.bf16 %v1574, %v1572
    %v1605 = vpack.c.bf16 %v1577, %v1575
    %v1606 = vpack.c.bf16 %v1578, %v1576
    %v1607 = vpack.c.bf16 %v1581, %v1579
    %v1608 = vpack.c.bf16 %v1582, %v1580
    %v1609 = vpack.c.bf16 %v1585, %v1583
    %v1610 = vpack.c.bf16 %v1586, %v1584
    %v1611 = vpack.c.bf16 %v1589, %v1587
    %v1612 = vpack.c.bf16 %v1590, %v1588
    %v1613 = vpack.c.bf16 %v1593, %v1591
    %v1614 = vpack.c.bf16 %v1594, %v1592
    %v1615 = vpack.c.bf16 %v1597, %v1595
    %v1616 = vpack.c.bf16 %v1598, %v1596
    %v1617 = vpack.c.bf16 %v1601, %v1599
    %v1618 = vpack.c.bf16 %v1602, %v1600
    %v1619 = vld [vmem:[#allocation7] sm:$0xff]
    %v1620 = vld [vmem:[#allocation7 + $0x8] sm:$0xff]
    %v1621 = vld [vmem:[#allocation7 + $0x10] sm:$0xff]
    %v1622 = vld [vmem:[#allocation7 + $0x18] sm:$0xff]
    %v1623 = vld [vmem:[#allocation7 + $0x20] sm:$0xff]
    %v1624 = vld [vmem:[#allocation7 + $0x28] sm:$0xff]
    %v1625 = vld [vmem:[#allocation7 + $0x30] sm:$0xff]
    %v1626 = vld [vmem:[#allocation7 + $0x38] sm:$0xff]
    %v1627 = vld [vmem:[#allocation7 + $0x40] sm:$0xff]
    %v1628 = vld [vmem:[#allocation7 + $0x48] sm:$0xff]
    %v1629 = vld [vmem:[#allocation7 + $0x50] sm:$0xff]
    %v1630 = vld [vmem:[#allocation7 + $0x58] sm:$0xff]
    %v1631 = vld [vmem:[#allocation7 + $0x60] sm:$0xff]
    %v1632 = vld [vmem:[#allocation7 + $0x68] sm:$0xff]
    %v1633 = vld [vmem:[#allocation7 + $0x70] sm:$0xff]
    %v1634 = vld [vmem:[#allocation7 + $0x78] sm:$0xff]
    %v1635 = vld [vmem:[#allocation7 + $0x80] sm:$0xff]
    %v1636 = vld [vmem:[#allocation7 + $0x88] sm:$0xff]
    %v1637 = vld [vmem:[#allocation7 + $0x90] sm:$0xff]
    %v1638 = vld [vmem:[#allocation7 + $0x98] sm:$0xff]
    %v1639 = vld [vmem:[#allocation7 + $0xa0] sm:$0xff]
    %v1640 = vld [vmem:[#allocation7 + $0xa8] sm:$0xff]
    %v1641 = vld [vmem:[#allocation7 + $0xb0] sm:$0xff]
    %v1642 = vld [vmem:[#allocation7 + $0xb8] sm:$0xff]
    %v1643 = vld [vmem:[#allocation7 + $0xc0] sm:$0xff]
    %v1644 = vld [vmem:[#allocation7 + $0xc8] sm:$0xff]
    %v1645 = vld [vmem:[#allocation7 + $0xd0] sm:$0xff]
    %v1646 = vld [vmem:[#allocation7 + $0xd8] sm:$0xff]
    %v1647 = vld [vmem:[#allocation7 + $0xe0] sm:$0xff]
    %v1648 = vld [vmem:[#allocation7 + $0xe8] sm:$0xff]
    %v1649 = vld [vmem:[#allocation7 + $0xf0] sm:$0xff]
    %v1650 = vld [vmem:[#allocation7 + $0xf8] sm:$0xff]
    %v1651 = vld [vmem:[%s4] sm:$0x3]
    %v1653 = vlaneseq
    %v1654 = vshrl.u32 %v1653, 7
    %v1655 = vsub.s32 0, %v1654
    %v1656 = vrot.slane %v1651, %v1655
    %v1657 = vlaneseq
    %v1658 = vshrl.u32 %v1657, 7
    %v1659 = vsub.s32 1, %v1658
    %v1660 = vrot.slane %v1651, %v1659
    %v1695 = vunpack.c.l.b16 %v1619
    %v1696 = vunpack.c.h.b16 %v1619
    %v1697 = vunpack.c.l.b16 %v1620
    %v1698 = vunpack.c.h.b16 %v1620
    %v1699 = vunpack.c.l.b16 %v1621
    %v1700 = vunpack.c.h.b16 %v1621
    %v1701 = vunpack.c.l.b16 %v1622
    %v1702 = vunpack.c.h.b16 %v1622
    %v1703 = vunpack.c.l.b16 %v1623
    %v1704 = vunpack.c.h.b16 %v1623
    %v1705 = vunpack.c.l.b16 %v1624
    %v1706 = vunpack.c.h.b16 %v1624
    %v1707 = vunpack.c.l.b16 %v1625
    %v1708 = vunpack.c.h.b16 %v1625
    %v1709 = vunpack.c.l.b16 %v1626
    %v1710 = vunpack.c.h.b16 %v1626
    %v1711 = vunpack.c.l.b16 %v1627
    %v1712 = vunpack.c.h.b16 %v1627
    %v1713 = vunpack.c.l.b16 %v1628
    %v1714 = vunpack.c.h.b16 %v1628
    %v1715 = vunpack.c.l.b16 %v1629
    %v1716 = vunpack.c.h.b16 %v1629
    %v1717 = vunpack.c.l.b16 %v1630
    %v1718 = vunpack.c.h.b16 %v1630
    %v1719 = vunpack.c.l.b16 %v1631
    %v1720 = vunpack.c.h.b16 %v1631
    %v1721 = vunpack.c.l.b16 %v1632
    %v1722 = vunpack.c.h.b16 %v1632
    %v1723 = vunpack.c.l.b16 %v1633
    %v1724 = vunpack.c.h.b16 %v1633
    %v1725 = vunpack.c.l.b16 %v1634
    %v1726 = vunpack.c.h.b16 %v1634
    %v1727 = vunpack.c.l.b16 %v1635
    %v1728 = vunpack.c.h.b16 %v1635
    %v1729 = vunpack.c.l.b16 %v1636
    %v1730 = vunpack.c.h.b16 %v1636
    %v1731 = vunpack.c.l.b16 %v1637
    %v1732 = vunpack.c.h.b16 %v1637
    %v1733 = vunpack.c.l.b16 %v1638
    %v1734 = vunpack.c.h.b16 %v1638
    %v1735 = vunpack.c.l.b16 %v1639
    %v1736 = vunpack.c.h.b16 %v1639
    %v1737 = vunpack.c.l.b16 %v1640
    %v1738 = vunpack.c.h.b16 %v1640
    %v1739 = vunpack.c.l.b16 %v1641
    %v1740 = vunpack.c.h.b16 %v1641
    %v1741 = vunpack.c.l.b16 %v1642
    %v1742 = vunpack.c.h.b16 %v1642
    %v1743 = vunpack.c.l.b16 %v1643
    %v1744 = vunpack.c.h.b16 %v1643
    %v1745 = vunpack.c.l.b16 %v1644
    %v1746 = vunpack.c.h.b16 %v1644
    %v1747 = vunpack.c.l.b16 %v1645
    %v1748 = vunpack.c.h.b16 %v1645
    %v1749 = vunpack.c.l.b16 %v1646
    %v1750 = vunpack.c.h.b16 %v1646
    %v1751 = vunpack.c.l.b16 %v1647
    %v1752 = vunpack.c.h.b16 %v1647
    %v1753 = vunpack.c.l.b16 %v1648
    %v1754 = vunpack.c.h.b16 %v1648
    %v1755 = vunpack.c.l.b16 %v1649
    %v1756 = vunpack.c.h.b16 %v1649
    %v1757 = vunpack.c.l.b16 %v1650
    %v1758 = vunpack.c.h.b16 %v1650
    %v1759 = vpack.c.b16 %v1697, %v1695
    %v1760 = vpack.c.b16 %v1698, %v1696
    %v1761 = vpack.c.b16 %v1701, %v1699
    %v1762 = vpack.c.b16 %v1702, %v1700
    %v1763 = vpack.c.b16 %v1705, %v1703
    %v1764 = vpack.c.b16 %v1706, %v1704
    %v1765 = vpack.c.b16 %v1709, %v1707
    %v1766 = vpack.c.b16 %v1710, %v1708
    %v1767 = vpack.c.b16 %v1713, %v1711
    %v1768 = vpack.c.b16 %v1714, %v1712
    %v1769 = vpack.c.b16 %v1717, %v1715
    %v1770 = vpack.c.b16 %v1718, %v1716
    %v1771 = vpack.c.b16 %v1721, %v1719
    %v1772 = vpack.c.b16 %v1722, %v1720
    %v1773 = vpack.c.b16 %v1725, %v1723
    %v1774 = vpack.c.b16 %v1726, %v1724
    %v1775 = vpack.c.b16 %v1729, %v1727
    %v1776 = vpack.c.b16 %v1730, %v1728
    %v1777 = vpack.c.b16 %v1733, %v1731
    %v1778 = vpack.c.b16 %v1734, %v1732
    %v1779 = vpack.c.b16 %v1737, %v1735
    %v1780 = vpack.c.b16 %v1738, %v1736
    %v1781 = vpack.c.b16 %v1741, %v1739
    %v1782 = vpack.c.b16 %v1742, %v1740
    %v1783 = vpack.c.b16 %v1745, %v1743
    %v1784 = vpack.c.b16 %v1746, %v1744
    %v1785 = vpack.c.b16 %v1749, %v1747
    %v1786 = vpack.c.b16 %v1750, %v1748
    %v1787 = vpack.c.b16 %v1753, %v1751
    %v1788 = vpack.c.b16 %v1754, %v1752
    %v1789 = vpack.c.b16 %v1757, %v1755
    %v1790 = vpack.c.b16 %v1758, %v1756
    %1823 = vmatprep.subr.bf16.mxu0 %v1760
    %1824 = vmatpush1.bf16.msra.mxu0 %v1759
    %1825 = vmatprep.subr.bf16.mxu0 %v1762
    %1826 = vmatpush1.bf16.msra.mxu0 %v1761
    %1827 = vmatprep.subr.bf16.mxu0 %v1764
    %1828 = vmatpush1.bf16.msra.mxu0 %v1763
    %1829 = vmatprep.subr.bf16.mxu0 %v1766
    %1830 = vmatpush1.bf16.msra.mxu0 %v1765
    %1831 = vmatprep.subr.bf16.mxu0 %v1768
    %1832 = vmatpush1.bf16.msra.mxu0 %v1767
    %1833 = vmatprep.subr.bf16.mxu0 %v1770
    %1834 = vmatpush1.bf16.msra.mxu0 %v1769
    %1835 = vmatprep.subr.bf16.mxu0 %v1772
    %1836 = vmatpush1.bf16.msra.mxu0 %v1771
    %1837 = vmatprep.subr.bf16.mxu0 %v1774
    %1838 = vmatpush1.bf16.msra.mxu0 %v1773
    %1839 = vmatprep.subr.bf16.mxu0 %v1776
    %1840 = vmatpush1.bf16.msra.mxu0 %v1775
    %1841 = vmatprep.subr.bf16.mxu0 %v1778
    %1842 = vmatpush1.bf16.msra.mxu0 %v1777
    %1843 = vmatprep.subr.bf16.mxu0 %v1780
    %1844 = vmatpush1.bf16.msra.mxu0 %v1779
    %1845 = vmatprep.subr.bf16.mxu0 %v1782
    %1846 = vmatpush1.bf16.msra.mxu0 %v1781
    %1847 = vmatprep.subr.bf16.mxu0 %v1784
    %1848 = vmatpush1.bf16.msra.mxu0 %v1783
    %1849 = vmatprep.subr.bf16.mxu0 %v1786
    %1850 = vmatpush1.bf16.msra.mxu0 %v1785
    %1851 = vmatprep.subr.bf16.mxu0 %v1788
    %1852 = vmatpush1.bf16.msra.mxu0 %v1787
    %1853 = vmatprep.subr.bf16.mxu0 %v1790
    %1854 = vmatpush1.bf16.msra.mxu0 %v1789
    %1855 = vmatprep.mubr.bf16.mxu0 %v1604
    %1856 = vmatmul.mubr.bf16.gmra.mrb[0].mxu0 %v1603
    %v1857 = vpop.f32.mrb[0].mxu0
    %v1858 = vadd.f32 %v1656, %v1857
    %v1859 = vpop.f32.mrb[0].mxu0
    %v1860 = vadd.f32 %v1660, %v1859
    %v1861 = vpop.f32.mrb[0].mxu0
    %v1862 = vadd.f32 %v1656, %v1861
    %v1863 = vpop.f32.mrb[0].mxu0
    %v1864 = vadd.f32 %v1660, %v1863
    %1865 = vmatprep.mubr.bf16.mxu0 %v1606
    %1866 = vmatmul.mubr.bf16.gmra.mrb[0].mxu0 %v1605
    %v1867 = vpop.f32.mrb[0].mxu0
    %v1868 = vadd.f32 %v1656, %v1867
    %v1869 = vpop.f32.mrb[0].mxu0
    %v1870 = vadd.f32 %v1660, %v1869
    %v1871 = vpop.f32.mrb[0].mxu0
    %v1872 = vadd.f32 %v1656, %v1871
    %v1873 = vpop.f32.mrb[0].mxu0
    %v1874 = vadd.f32 %v1660, %v1873
    %1875 = vmatprep.mubr.bf16.mxu0 %v1608
    %1876 = vmatmul.mubr.bf16.gmra.mrb[0].mxu0 %v1607
    %v1877 = vpop.f32.mrb[0].mxu0
    %v1878 = vadd.f32 %v1656, %v1877
    %v1879 = vpop.f32.mrb[0].mxu0
    %v1880 = vadd.f32 %v1660, %v1879
    %v1881 = vpop.f32.mrb[0].mxu0
    %v1882 = vadd.f32 %v1656, %v1881
    %v1883 = vpop.f32.mrb[0].mxu0
    %v1884 = vadd.f32 %v1660, %v1883
    %1885 = vmatprep.mubr.bf16.mxu0 %v1610
    %1886 = vmatmul.mubr.bf16.gmra.mrb[0].mxu0 %v1609
    %v1887 = vpop.f32.mrb[0].mxu0
    %v1888 = vadd.f32 %v1656, %v1887
    %v1889 = vpop.f32.mrb[0].mxu0
    %v1890 = vadd.f32 %v1660, %v1889
    %v1891 = vpop.f32.mrb[0].mxu0
    %v1892 = vadd.f32 %v1656, %v1891
    %v1893 = vpop.f32.mrb[0].mxu0
    %v1894 = vadd.f32 %v1660, %v1893
    %1895 = vmatprep.mubr.bf16.mxu0 %v1612
    %1896 = vmatmul.mubr.bf16.gmra.mrb[0].mxu0 %v1611
    %v1897 = vpop.f32.mrb[0].mxu0
    %v1898 = vadd.f32 %v1656, %v1897
    %v1899 = vpop.f32.mrb[0].mxu0
    %v1900 = vadd.f32 %v1660, %v1899
    %v1901 = vpop.f32.mrb[0].mxu0
    %v1902 = vadd.f32 %v1656, %v1901
    %v1903 = vpop.f32.mrb[0].mxu0
    %v1904 = vadd.f32 %v1660, %v1903
    %1905 = vmatprep.mubr.bf16.mxu0 %v1614
    %1906 = vmatmul.mubr.bf16.gmra.mrb[0].mxu0 %v1613
    %v1907 = vpop.f32.mrb[0].mxu0
    %v1908 = vadd.f32 %v1656, %v1907
    %v1909 = vpop.f32.mrb[0].mxu0
    %v1910 = vadd.f32 %v1660, %v1909
    %v1911 = vpop.f32.mrb[0].mxu0
    %v1912 = vadd.f32 %v1656, %v1911
    %v1913 = vpop.f32.mrb[0].mxu0
    %v1914 = vadd.f32 %v1660, %v1913
    %1915 = vmatprep.mubr.bf16.mxu0 %v1616
    %1916 = vmatmul.mubr.bf16.gmra.mrb[0].mxu0 %v1615
    %v1917 = vpop.f32.mrb[0].mxu0
    %v1918 = vadd.f32 %v1656, %v1917
    %v1919 = vpop.f32.mrb[0].mxu0
    %v1920 = vadd.f32 %v1660, %v1919
    %v1921 = vpop.f32.mrb[0].mxu0
    %v1922 = vadd.f32 %v1656, %v1921
    %v1923 = vpop.f32.mrb[0].mxu0
    %v1924 = vadd.f32 %v1660, %v1923
    %1925 = vmatprep.mubr.bf16.mxu0 %v1618
    %1926 = vmatmul.mubr.bf16.gmra.mrb[0].mxu0 %v1617
    %v1927 = vpop.f32.mrb[0].mxu0
    %v1928 = vadd.f32 %v1656, %v1927
    %v1929 = vpop.f32.mrb[0].mxu0
    %v1930 = vadd.f32 %v1660, %v1929
    %v1931 = vpop.f32.mrb[0].mxu0
    %v1932 = vadd.f32 %v1656, %v1931
    %v1933 = vpop.f32.mrb[0].mxu0
    %v1934 = vadd.f32 %v1660, %v1933
    %1935 = vdwg.mxu0
    %v1936 = vmax.f32 %v1858, 0.0
    %v1937 = vmax.f32 %v1860, 0.0
    %v1938 = vmax.f32 %v1862, 0.0
    %v1939 = vmax.f32 %v1864, 0.0
    %v1940 = vmax.f32 %v1868, 0.0
    %v1941 = vmax.f32 %v1870, 0.0
    %v1942 = vmax.f32 %v1872, 0.0
    %v1943 = vmax.f32 %v1874, 0.0
    %v1944 = vmax.f32 %v1878, 0.0
    %v1945 = vmax.f32 %v1880, 0.0
    %v1946 = vmax.f32 %v1882, 0.0
    %v1947 = vmax.f32 %v1884, 0.0
    %v1948 = vmax.f32 %v1888, 0.0
    %v1949 = vmax.f32 %v1890, 0.0
    %v1950 = vmax.f32 %v1892, 0.0
    %v1951 = vmax.f32 %v1894, 0.0
    %v1952 = vmax.f32 %v1898, 0.0
    %v1953 = vmax.f32 %v1900, 0.0
    %v1954 = vmax.f32 %v1902, 0.0
    %v1955 = vmax.f32 %v1904, 0.0
    %v1956 = vmax.f32 %v1908, 0.0
    %v1957 = vmax.f32 %v1910, 0.0
    %v1958 = vmax.f32 %v1912, 0.0
    %v1959 = vmax.f32 %v1914, 0.0
    %v1960 = vmax.f32 %v1918, 0.0
    %v1961 = vmax.f32 %v1920, 0.0
    %v1962 = vmax.f32 %v1922, 0.0
    %v1963 = vmax.f32 %v1924, 0.0
    %v1964 = vmax.f32 %v1928, 0.0
    %v1965 = vmax.f32 %v1930, 0.0
    %v1966 = vmax.f32 %v1932, 0.0
    %v1967 = vmax.f32 %v1934, 0.0
    %v1968 = vpack.c.bf16 %v1938, %v1936
    %v1969 = vpack.c.bf16 %v1939, %v1937
    %v1970 = vpack.c.bf16 %v1942, %v1940
    %v1971 = vpack.c.bf16 %v1943, %v1941
    %v1972 = vpack.c.bf16 %v1946, %v1944
    %v1973 = vpack.c.bf16 %v1947, %v1945
    %v1974 = vpack.c.bf16 %v1950, %v1948
    %v1975 = vpack.c.bf16 %v1951, %v1949
    %v1976 = vpack.c.bf16 %v1954, %v1952
    %v1977 = vpack.c.bf16 %v1955, %v1953
    %v1978 = vpack.c.bf16 %v1958, %v1956
    %v1979 = vpack.c.bf16 %v1959, %v1957
    %v1980 = vpack.c.bf16 %v1962, %v1960
    %v1981 = vpack.c.bf16 %v1963, %v1961
    %v1982 = vpack.c.bf16 %v1966, %v1964
    %v1983 = vpack.c.bf16 %v1967, %v1965
    %v1984 = vld [vmem:[#allocation8] sm:$0xf]
    %v1985 = vld [vmem:[#allocation8 + $0x4] sm:$0xf]
    %v1986 = vld [vmem:[#allocation8 + $0x8] sm:$0xf]
    %v1987 = vld [vmem:[#allocation8 + $0xc] sm:$0xf]
    %v1988 = vld [vmem:[#allocation8 + $0x10] sm:$0xf]
    %v1989 = vld [vmem:[#allocation8 + $0x14] sm:$0xf]
    %v1990 = vld [vmem:[#allocation8 + $0x18] sm:$0xf]
    %v1991 = vld [vmem:[#allocation8 + $0x1c] sm:$0xf]
    %v1992 = vld [vmem:[#allocation8 + $0x20] sm:$0xf]
    %v1993 = vld [vmem:[#allocation8 + $0x24] sm:$0xf]
    %v1994 = vld [vmem:[#allocation8 + $0x28] sm:$0xf]
    %v1995 = vld [vmem:[#allocation8 + $0x2c] sm:$0xf]
    %v1996 = vld [vmem:[#allocation8 + $0x30] sm:$0xf]
    %v1997 = vld [vmem:[#allocation8 + $0x34] sm:$0xf]
    %v1998 = vld [vmem:[#allocation8 + $0x38] sm:$0xf]
    %v1999 = vld [vmem:[#allocation8 + $0x3c] sm:$0xf]
    %v2000 = vld [vmem:[#allocation8 + $0x40] sm:$0xf]
    %v2001 = vld [vmem:[#allocation8 + $0x44] sm:$0xf]
    %v2002 = vld [vmem:[#allocation8 + $0x48] sm:$0xf]
    %v2003 = vld [vmem:[#allocation8 + $0x4c] sm:$0xf]
    %v2004 = vld [vmem:[#allocation8 + $0x50] sm:$0xf]
    %v2005 = vld [vmem:[#allocation8 + $0x54] sm:$0xf]
    %v2006 = vld [vmem:[#allocation8 + $0x58] sm:$0xf]
    %v2007 = vld [vmem:[#allocation8 + $0x5c] sm:$0xf]
    %v2008 = vld [vmem:[#allocation8 + $0x60] sm:$0xf]
    %v2009 = vld [vmem:[#allocation8 + $0x64] sm:$0xf]
    %v2010 = vld [vmem:[#allocation8 + $0x68] sm:$0xf]
    %v2011 = vld [vmem:[#allocation8 + $0x6c] sm:$0xf]
    %v2012 = vld [vmem:[#allocation8 + $0x70] sm:$0xf]
    %v2013 = vld [vmem:[#allocation8 + $0x74] sm:$0xf]
    %v2014 = vld [vmem:[#allocation8 + $0x78] sm:$0xf]
    %v2015 = vld [vmem:[#allocation8 + $0x7c] sm:$0xf]
    %v2016 = vld [vmem:[%s6] sm:$0x1]
    %v2018 = vlaneseq
    %v2019 = vshrl.u32 %v2018, 7
    %v2020 = vsub.s32 0, %v2019
    %v2021 = vrot.slane %v2016, %v2020
    %v2055 = vunpack.c.l.b16 %v1984
    %v2056 = vunpack.c.l.b16 %v1985
    %v2057 = vunpack.c.l.b16 %v1986
    %v2058 = vunpack.c.l.b16 %v1987
    %v2059 = vunpack.c.l.b16 %v1988
    %v2060 = vunpack.c.l.b16 %v1989
    %v2061 = vunpack.c.l.b16 %v1990
    %v2062 = vunpack.c.l.b16 %v1991
    %v2063 = vunpack.c.l.b16 %v1992
    %v2064 = vunpack.c.l.b16 %v1993
    %v2065 = vunpack.c.l.b16 %v1994
    %v2066 = vunpack.c.l.b16 %v1995
    %v2067 = vunpack.c.l.b16 %v1996
    %v2068 = vunpack.c.l.b16 %v1997
    %v2069 = vunpack.c.l.b16 %v1998
    %v2070 = vunpack.c.l.b16 %v1999
    %v2071 = vunpack.c.l.b16 %v2000
    %v2072 = vunpack.c.l.b16 %v2001
    %v2073 = vunpack.c.l.b16 %v2002
    %v2074 = vunpack.c.l.b16 %v2003
    %v2075 = vunpack.c.l.b16 %v2004
    %v2076 = vunpack.c.l.b16 %v2005
    %v2077 = vunpack.c.l.b16 %v2006
    %v2078 = vunpack.c.l.b16 %v2007
    %v2079 = vunpack.c.l.b16 %v2008
    %v2080 = vunpack.c.l.b16 %v2009
    %v2081 = vunpack.c.l.b16 %v2010
    %v2082 = vunpack.c.l.b16 %v2011
    %v2083 = vunpack.c.l.b16 %v2012
    %v2084 = vunpack.c.l.b16 %v2013
    %v2085 = vunpack.c.l.b16 %v2014
    %v2086 = vunpack.c.l.b16 %v2015
    %v2087 = vpack.c.b16 %v2056, %v2055
    %v2088 = vpack.c.b16 %v2058, %v2057
    %v2089 = vpack.c.b16 %v2060, %v2059
    %v2090 = vpack.c.b16 %v2062, %v2061
    %v2091 = vpack.c.b16 %v2064, %v2063
    %v2092 = vpack.c.b16 %v2066, %v2065
    %v2093 = vpack.c.b16 %v2068, %v2067
    %v2094 = vpack.c.b16 %v2070, %v2069
    %v2095 = vpack.c.b16 %v2072, %v2071
    %v2096 = vpack.c.b16 %v2074, %v2073
    %v2097 = vpack.c.b16 %v2076, %v2075
    %v2098 = vpack.c.b16 %v2078, %v2077
    %v2099 = vpack.c.b16 %v2080, %v2079
    %v2100 = vpack.c.b16 %v2082, %v2081
    %v2101 = vpack.c.b16 %v2084, %v2083
    %v2102 = vpack.c.b16 %v2086, %v2085
    %2119 = vmatprep.subr.bf16.mxu0 0
    %2120 = vmatpush1.bf16.msra.mxu0 %v2087
    %2121 = vmatprep.subr.bf16.mxu0 0
    %2122 = vmatpush1.bf16.msra.mxu0 %v2088
    %2123 = vmatprep.subr.bf16.mxu0 0
    %2124 = vmatpush1.bf16.msra.mxu0 %v2089
    %2125 = vmatprep.subr.bf16.mxu0 0
    %2126 = vmatpush1.bf16.msra.mxu0 %v2090
    %2127 = vmatprep.subr.bf16.mxu0 0
    %2128 = vmatpush1.bf16.msra.mxu0 %v2091
    %2129 = vmatprep.subr.bf16.mxu0 0
    %2130 = vmatpush1.bf16.msra.mxu0 %v2092
    %2131 = vmatprep.subr.bf16.mxu0 0
    %2132 = vmatpush1.bf16.msra.mxu0 %v2093
    %2133 = vmatprep.subr.bf16.mxu0 0
    %2134 = vmatpush1.bf16.msra.mxu0 %v2094
    %2135 = vmatprep.subr.bf16.mxu0 0
    %2136 = vmatpush1.bf16.msra.mxu0 %v2095
    %2137 = vmatprep.subr.bf16.mxu0 0
    %2138 = vmatpush1.bf16.msra.mxu0 %v2096
    %2139 = vmatprep.subr.bf16.mxu0 0
    %2140 = vmatpush1.bf16.msra.mxu0 %v2097
    %2141 = vmatprep.subr.bf16.mxu0 0
    %2142 = vmatpush1.bf16.msra.mxu0 %v2098
    %2143 = vmatprep.subr.bf16.mxu0 0
    %2144 = vmatpush1.bf16.msra.mxu0 %v2099
    %2145 = vmatprep.subr.bf16.mxu0 0
    %2146 = vmatpush1.bf16.msra.mxu0 %v2100
    %2147 = vmatprep.subr.bf16.mxu0 0
    %2148 = vmatpush1.bf16.msra.mxu0 %v2101
    %2149 = vmatprep.subr.bf16.mxu0 0
    %2150 = vmatpush1.bf16.msra.mxu0 %v2102
    %2151 = vmatprep.mubr.bf16.mxu0 %v1969
    %2152 = vmatmul.mubr.bf16.gmra.mrb[0].mxu0 %v1968
    %v2153 = vpop.f32.mrb[0].mxu0
    %v2154 = vadd.f32 %v2021, %v2153
    %v2155 = vpop.f32.mrb[0].mxu0
    %v2156 = vpop.f32.mrb[0].mxu0
    %v2157 = vadd.f32 %v2021, %v2156
    %v2158 = vpop.f32.mrb[0].mxu0
    %2159 = vmatprep.mubr.bf16.mxu0 %v1971
    %2160 = vmatmul.mubr.bf16.gmra.mrb[0].mxu0 %v1970
    %v2161 = vpop.f32.mrb[0].mxu0
    %v2162 = vadd.f32 %v2021, %v2161
    %v2163 = vpop.f32.mrb[0].mxu0
    %v2164 = vpop.f32.mrb[0].mxu0
    %v2165 = vadd.f32 %v2021, %v2164
    %v2166 = vpop.f32.mrb[0].mxu0
    %2167 = vmatprep.mubr.bf16.mxu0 %v1973
    %2168 = vmatmul.mubr.bf16.gmra.mrb[0].mxu0 %v1972
    %v2169 = vpop.f32.mrb[0].mxu0
    %v2170 = vadd.f32 %v2021, %v2169
    %v2171 = vpop.f32.mrb[0].mxu0
    %v2172 = vpop.f32.mrb[0].mxu0
    %v2173 = vadd.f32 %v2021, %v2172
    %v2174 = vpop.f32.mrb[0].mxu0
    %2175 = vmatprep.mubr.bf16.mxu0 %v1975
    %2176 = vmatmul.mubr.bf16.gmra.mrb[0].mxu0 %v1974
    %v2177 = vpop.f32.mrb[0].mxu0
    %v2178 = vadd.f32 %v2021, %v2177
    %v2179 = vpop.f32.mrb[0].mxu0
    %v2180 = vpop.f32.mrb[0].mxu0
    %v2181 = vadd.f32 %v2021, %v2180
    %v2182 = vpop.f32.mrb[0].mxu0
    %2183 = vmatprep.mubr.bf16.mxu0 %v1977
    %2184 = vmatmul.mubr.bf16.gmra.mrb[0].mxu0 %v1976
    %v2185 = vpop.f32.mrb[0].mxu0
    %v2186 = vadd.f32 %v2021, %v2185
    %v2187 = vpop.f32.mrb[0].mxu0
    %v2188 = vpop.f32.mrb[0].mxu0
    %v2189 = vadd.f32 %v2021, %v2188
    %v2190 = vpop.f32.mrb[0].mxu0
    %2191 = vmatprep.mubr.bf16.mxu0 %v1979
    %2192 = vmatmul.mubr.bf16.gmra.mrb[0].mxu0 %v1978
    %v2193 = vpop.f32.mrb[0].mxu0
    %v2194 = vadd.f32 %v2021, %v2193
    %v2195 = vpop.f32.mrb[0].mxu0
    %v2196 = vpop.f32.mrb[0].mxu0
    %v2197 = vadd.f32 %v2021, %v2196
    %v2198 = vpop.f32.mrb[0].mxu0
    %2199 = vmatprep.mubr.bf16.mxu0 %v1981
    %2200 = vmatmul.mubr.bf16.gmra.mrb[0].mxu0 %v1980
    %v2201 = vpop.f32.mrb[0].mxu0
    %v2202 = vadd.f32 %v2021, %v2201
    %v2203 = vpop.f32.mrb[0].mxu0
    %v2204 = vpop.f32.mrb[0].mxu0
    %v2205 = vadd.f32 %v2021, %v2204
    %v2206 = vpop.f32.mrb[0].mxu0
    %2207 = vmatprep.mubr.bf16.mxu0 %v1983
    %2208 = vmatmul.mubr.bf16.gmra.mrb[0].mxu0 %v1982
    %v2209 = vpop.f32.mrb[0].mxu0
    %v2210 = vadd.f32 %v2021, %v2209
    %v2211 = vpop.f32.mrb[0].mxu0
    %v2212 = vpop.f32.mrb[0].mxu0
    %v2213 = vadd.f32 %v2021, %v2212
    %v2214 = vpop.f32.mrb[0].mxu0
    %2215 = vdwg.mxu0
    %2216 = vst [vmem:[#allocation10] sm:$0xff] %v2154
    %2217 = vst [vmem:[#allocation10 + $0x8] sm:$0xff] %v2157
    %2218 = vst [vmem:[#allocation10 + $0x10] sm:$0xff] %v2162
    %2219 = vst [vmem:[#allocation10 + $0x18] sm:$0xff] %v2165
    %2220 = vst [vmem:[#allocation10 + $0x20] sm:$0xff] %v2170
    %2221 = vst [vmem:[#allocation10 + $0x28] sm:$0xff] %v2173
    %2222 = vst [vmem:[#allocation10 + $0x30] sm:$0xff] %v2178
    %2223 = vst [vmem:[#allocation10 + $0x38] sm:$0xff] %v2181
    %2224 = vst [vmem:[#allocation10 + $0x40] sm:$0xff] %v2186
    %2225 = vst [vmem:[#allocation10 + $0x48] sm:$0xff] %v2189
    %2226 = vst [vmem:[#allocation10 + $0x50] sm:$0xff] %v2194
    %2227 = vst [vmem:[#allocation10 + $0x58] sm:$0xff] %v2197
    %2228 = vst [vmem:[#allocation10 + $0x60] sm:$0xff] %v2202
    %2229 = vst [vmem:[#allocation10 + $0x68] sm:$0xff] %v2205
    %2230 = vst [vmem:[#allocation10 + $0x70] sm:$0xff] %v2210
    %2231 = vst [vmem:[#allocation10 + $0x78] sm:$0xff] %v2213
    // Predicated region
    $region46: #{tpu_custom_call.1} parent=1 // pred_check
      _
    $region47: #{tpu_custom_call.1} parent=1 // pred_check_branch
      %2233 = sbr.rel (0) target = $region49
    $region48: #{tpu_custom_call.1} parent=1 // pred_region
      %s2235 = ssub.s32 2048, 2048
      %2236 = vsyncadd [#allocation4], %s2235
      %s2237 = sshll.u32 [#allocation10], 4
      %s2238 = int_to_ptr.vmem [resolvable:$true] %s2237
      %2243 = dma.vmem_to_hbm [thread:$0]  %s2238, 2048, %s7, [#allocation4], 128, 128, 8
    $region49: #{tpu_custom_call.1} parent=1 // pred_fallthru
      _
    // Predicated region
    $region50: #{tpu_custom_call.1} parent=1 // pred_check
      _
    $region51: #{tpu_custom_call.1} parent=1 // pred_check_branch
      %2245 = sbr.rel (0) target = $region53
    $region52: #{tpu_custom_call.1} parent=1 // pred_region
      %2246 = dma.done [#allocation4], 2048
    $region53: #{tpu_custom_call.1} parent=1 // pred_fallthru
      _
    %2247 = vsyncpa [#allocation3], 1
    %2248 = vsyncpa [#allocation6], 1
    %2249 = vsyncpa [#allocation9], 1
    %2250 = vsyncpa [#allocation4], 1

</llo_original>
